<compile_context>
chip_gen: v5e
topology: v5e:2x2
jax: 0.10.0
libtpu: 0.0.40
codegen_flags: <defaults>
</compile_context>

<pallas_src>
import jax
import jax.numpy as jnp
from jax.experimental import pallas as pl
from jax.experimental.pallas import tpu as pltpu

IN_DIM = 1 * 28 * 28           # 784
H1 = 512
H2 = 256
OUT_DIM = 1
OUT_PAD = 128                  # lane-dense output width (column 0 is the real logit)


def _round_up(x, m):
    return (x + m - 1) // m * m


def _choose_tile(batch):
    """Pick (tm, b_pad): batch tile rows and padded batch."""
    b_aligned = _round_up(batch, 16)          # bf16 sublane packing
    if b_aligned <= 256:
        return b_aligned, b_aligned           # single small tile
    b_pad = _round_up(b_aligned, 256)
    if b_pad >= 2048:
        tm = 1024                             # big tile: amortize ~0.35us/step grid overhead
    else:
        tm = b_pad // 2                       # >= 2 grid steps -> v7x megacore has work to split
    return tm, _round_up(b_pad, tm)


def _discriminator_kernel(x_ref, w1_ref, b1_ref, w2_ref, b2_ref, w3_ref, b3_ref,
                          o_ref):
    """Fused MLP tile.

    x_ref  : (TM, 784)  f32   (flattened image rows; cast to bf16 in VMEM)
    w1_ref : (784, 512) bf16
    b1_ref : (1, 512)   f32
    w2_ref : (512, 256) bf16
    b2_ref : (1, 256)   f32
    w3_ref : (256, 128) bf16  (real weights in column 0, zeros elsewhere)
    b3_ref : (1,)       f32   (SMEM scalar)
    o_ref  : (TM, 128)  f32   (lane-dense; column 0 holds sigmoid(logit))
    """
    # Layer 1: bf16 MXU inputs, f32 accumulation. K=784 is handled by Mosaic's
    # internal masking; same K-granule count as padding to 896/1024.
    x = x_ref[...].astype(jnp.bfloat16)
    h1 = jnp.dot(x, w1_ref[...],
                 preferred_element_type=jnp.float32) + b1_ref[...]
    h1 = jnp.maximum(h1, 0.2 * h1)                       # LeakyReLU(0.2) -> one vmax

    # Layer 2: MXU.
    h2 = jnp.dot(h1.astype(jnp.bfloat16), w2_ref[...],
                 preferred_element_type=jnp.float32) + b2_ref[...]
    h2 = jnp.maximum(h2, 0.2 * h2)                       # LeakyReLU(0.2)

    # Layer 3: MXU against the 128-wide zero-padded weight slab so the output
    # block stays lane-dense (unmasked stores). Bias added to every column;
    # only column 0 is kept by the wrapper.
    h3 = jnp.dot(h2.astype(jnp.bfloat16), w3_ref[...],
                 preferred_element_type=jnp.float32) + b3_ref[0]

    # Exact sigmoid (EUP exp; workload is tiny, no need for approx reciprocal).
    o_ref[...] = (1.0 / (1.0 + jnp.exp(-h3))).astype(o_ref.dtype)


def prepare_params(params):
    """One-time conversion of f32 (in, out)-layout params into kernel layout."""
    w1, b1, w2, b2, w3, b3 = params
    w1p = w1.astype(jnp.bfloat16)                                       # (784, 512)
    b1p = b1.reshape(1, H1).astype(jnp.float32)                         # (1, 512)
    w2p = w2.astype(jnp.bfloat16)                                       # (512, 256)
    b2p = b2.reshape(1, H2).astype(jnp.float32)                         # (1, 256)
    w3p = (jnp.zeros((H2, OUT_PAD), jnp.float32)
           .at[:, 0].set(w3.reshape(H2))
           .astype(jnp.bfloat16))                                       # (256, 128)
    b3s = b3.reshape(1).astype(jnp.float32)                             # (1,) SMEM
    return (w1p, b1p, w2p, b2p, w3p, b3s)


@jax.jit
def discriminator_forward(img, prepped):
    """img: (B, 1, 28, 28) float32 NCHW. prepped: output of prepare_params.

    Returns (B, 1) float32.
    """
    w1p, b1p, w2p, b2p, w3p, b3s = prepped
    B = img.shape[0]

    # Flatten (== img.view(B, -1)); keep f32 so x is read from HBM exactly once.
    x = img.reshape(B, IN_DIM).astype(jnp.float32)

    tm, b_pad = _choose_tile(B)
    if b_pad != B:
        x = jnp.pad(x, ((0, b_pad - B), (0, 0)))

    grid = (b_pad // tm,)

    flops = 2 * b_pad * (IN_DIM * H1 + H1 * H2 + H2 * OUT_PAD)
    bytes_accessed = (b_pad * IN_DIM * 4
                      + (w1p.size + w2p.size + w3p.size) * 2
                      + (b1p.size + b2p.size + b3s.size) * 4
                      + b_pad * OUT_PAD * 4)

    # TODO(synk): pipeline_mode=pl.Buffered(1) on the constant-index weight
    # specs would save ~1.2 MiB VMEM; omitted since the footprint (<~16 MiB at
    # tm=1024) is already well under the scoped VMEM limit on all generations.
    out = pl.pallas_call(
        _discriminator_kernel,
        out_shape=jax.ShapeDtypeStruct((b_pad, OUT_PAD), jnp.float32),
        grid=grid,
        in_specs=[
            pl.BlockSpec((tm, IN_DIM), lambda i: (i, 0)),       # x tile (pipelined)
            pl.BlockSpec((IN_DIM, H1), lambda i: (0, 0)),       # w1 (VMEM-resident)
            pl.BlockSpec((1, H1), lambda i: (0, 0)),            # b1
            pl.BlockSpec((H1, H2), lambda i: (0, 0)),           # w2
            pl.BlockSpec((1, H2), lambda i: (0, 0)),            # b2
            pl.BlockSpec((H2, OUT_PAD), lambda i: (0, 0)),      # w3 slab
            pl.BlockSpec(memory_space=pltpu.MemorySpace.SMEM),  # b3 scalar
        ],
        out_specs=pl.BlockSpec((tm, OUT_PAD), lambda i: (i, 0)),
        compiler_params=pltpu.CompilerParams(
            dimension_semantics=("parallel",)),
        cost_estimate=pl.CostEstimate(
            flops=flops, transcendentals=b_pad * OUT_PAD,
            bytes_accessed=bytes_accessed),
    )(x, w1p, b1p, w2p, b2p, w3p, b3s)

    return out[:B, :OUT_DIM]


def init_params(key):
    """Deterministic init matching nn.Linear defaults: U(-1/sqrt(fan_in), +)."""
    ks = jax.random.split(key, 6)

    def linear(kw, kb, fan_in, fan_out):
        bound = 1.0 / jnp.sqrt(jnp.float32(fan_in))
        w = jax.random.uniform(kw, (fan_in, fan_out), jnp.float32, -bound, bound)
        b = jax.random.uniform(kb, (1, fan_out), jnp.float32, -bound, bound)
        return w, b

    w1, b1 = linear(ks[0], ks[1], IN_DIM, H1)
    w2, b2 = linear(ks[2], ks[3], H1, H2)
    w3, b3 = linear(ks[4], ks[5], H2, OUT_DIM)
    return (w1, b1, w2, b2, w3, b3)


def _reference_forward(img, params):
    """Pure-JAX f32 reference of the PyTorch module."""
    w1, b1, w2, b2, w3, b3 = params
    x = img.reshape(img.shape[0], -1)
    h = x @ w1 + b1
    h = jnp.where(h > 0, h, 0.2 * h)
    h = h @ w2 + b2
    h = jnp.where(h > 0, h, 0.2 * h)
    h = h @ w3 + b3
    return jax.nn.sigmoid(h)


if __name__ == "__main__":
    key = jax.random.PRNGKey(0)
    k_img, k_params = jax.random.split(key)

    B = 8
    img = jax.random.normal(k_img, (B, 1, 28, 28), dtype=jnp.float32)
    params = init_params(k_params)
    prepped = prepare_params(params)     # one-time weight prep (hoisted out of forward)

    out = discriminator_forward(img, prepped)
    jax.block_until_ready(out)

    ref = _reference_forward(img, params)
    assert out.shape == (B, OUT_DIM), out.shape
    # bf16 MXU inputs -> looser tolerance than pure f32.
    assert jnp.allclose(out, ref, atol=2e-2, rtol=2e-2), (
        float(jnp.max(jnp.abs(out - ref))))

    print("KERNEL_OK")
</pallas_src>

<mosaic_0001>
module attributes {stable_mosaic.version = 11 : i64} {
  func.func @_discriminator_kernel(%arg0: i32, %arg1: memref<16x784xf32, #tpu.memory_space<vmem>>, %arg2: memref<784x512xbf16, #tpu.memory_space<vmem>>, %arg3: memref<1x512xf32, #tpu.memory_space<vmem>>, %arg4: memref<512x256xbf16, #tpu.memory_space<vmem>>, %arg5: memref<1x256xf32, #tpu.memory_space<vmem>>, %arg6: memref<256x128xbf16, #tpu.memory_space<vmem>>, %arg7: memref<1xf32, #tpu.memory_space<smem>>, %arg8: memref<16x128xf32, #tpu.memory_space<vmem>>) attributes {dimension_semantics = [#tpu.dimension_semantics<parallel>], iteration_bounds = array<i64: 1>, scalar_prefetch = 0 : i64, scratch_operands = 0 : i64, tpu.core_type = #tpu.core_type<tc>, window_params = [{transform_indices = @transform_0, window_bounds = array<i64: 16, 784>}, {pipeline_mode = #tpu.pipeline_mode<synchronous>, transform_indices = @transform_1, window_bounds = array<i64: 784, 512>}, {pipeline_mode = #tpu.pipeline_mode<synchronous>, transform_indices = @transform_2, window_bounds = array<i64: 1, 512>}, {pipeline_mode = #tpu.pipeline_mode<synchronous>, transform_indices = @transform_3, window_bounds = array<i64: 512, 256>}, {pipeline_mode = #tpu.pipeline_mode<synchronous>, transform_indices = @transform_4, window_bounds = array<i64: 1, 256>}, {pipeline_mode = #tpu.pipeline_mode<synchronous>, transform_indices = @transform_5, window_bounds = array<i64: 256, 128>}, {transform_indices = @transform_6, window_bounds = array<i64: 1>}, {transform_indices = @transform_7, window_bounds = array<i64: 16, 128>}]} {
    %c0 = arith.constant 0 : index
    %c0_0 = arith.constant 0 : index
    %0 = vector.load %arg1[%c0, %c0_0] : memref<16x784xf32, #tpu.memory_space<vmem>>, vector<16x784xf32>
    %1 = arith.truncf %0 : vector<16x784xf32> to vector<16x784xbf16>
    %c0_1 = arith.constant 0 : index
    %c0_2 = arith.constant 0 : index
    %2 = vector.load %arg2[%c0_1, %c0_2] : memref<784x512xbf16, #tpu.memory_space<vmem>>, vector<784x512xbf16>
    %cst = arith.constant dense<0.000000e+00> : vector<16x512xf32>
    %3 = tpu.matmul %1, %2, %cst {dimension_numbers = #tpu.dot_dimension_numbers<[1], [0], [0], [1], [0, 0, 1, 1], [], []>} : vector<16x784xbf16>, vector<784x512xbf16>, vector<16x512xf32> -> vector<16x512xf32>
    %c0_3 = arith.constant 0 : index
    %c0_4 = arith.constant 0 : index
    %4 = vector.load %arg3[%c0_3, %c0_4] : memref<1x512xf32, #tpu.memory_space<vmem>>, vector<1x512xf32>
    %5 = vector.broadcast %4 : vector<1x512xf32> to vector<16x512xf32>
    %6 = arith.addf %3, %5 : vector<16x512xf32>
    %cst_5 = arith.constant 2.000000e-01 : f32
    %7 = vector.broadcast %cst_5 : f32 to vector<16x512xf32>
    %8 = arith.mulf %7, %6 : vector<16x512xf32>
    %9 = arith.maximumf %6, %8 : vector<16x512xf32>
    %10 = arith.truncf %9 : vector<16x512xf32> to vector<16x512xbf16>
    %c0_6 = arith.constant 0 : index
    %c0_7 = arith.constant 0 : index
    %11 = vector.load %arg4[%c0_6, %c0_7] : memref<512x256xbf16, #tpu.memory_space<vmem>>, vector<512x256xbf16>
    %cst_8 = arith.constant dense<0.000000e+00> : vector<16x256xf32>
    %12 = tpu.matmul %10, %11, %cst_8 {dimension_numbers = #tpu.dot_dimension_numbers<[1], [0], [0], [1], [0, 0, 1, 1], [], []>} : vector<16x512xbf16>, vector<512x256xbf16>, vector<16x256xf32> -> vector<16x256xf32>
    %c0_9 = arith.constant 0 : index
    %c0_10 = arith.constant 0 : index
    %13 = vector.load %arg5[%c0_9, %c0_10] : memref<1x256xf32, #tpu.memory_space<vmem>>, vector<1x256xf32>
    %14 = vector.broadcast %13 : vector<1x256xf32> to vector<16x256xf32>
    %15 = arith.addf %12, %14 : vector<16x256xf32>
    %cst_11 = arith.constant 2.000000e-01 : f32
    %16 = vector.broadcast %cst_11 : f32 to vector<16x256xf32>
    %17 = arith.mulf %16, %15 : vector<16x256xf32>
    %18 = arith.maximumf %15, %17 : vector<16x256xf32>
    %19 = arith.truncf %18 : vector<16x256xf32> to vector<16x256xbf16>
    %c0_12 = arith.constant 0 : index
    %c0_13 = arith.constant 0 : index
    %20 = vector.load %arg6[%c0_12, %c0_13] : memref<256x128xbf16, #tpu.memory_space<vmem>>, vector<256x128xbf16>
    %cst_14 = arith.constant dense<0.000000e+00> : vector<16x128xf32>
    %21 = tpu.matmul %19, %20, %cst_14 {dimension_numbers = #tpu.dot_dimension_numbers<[1], [0], [0], [1], [0, 0, 1, 1], [], []>} : vector<16x256xbf16>, vector<256x128xbf16>, vector<16x128xf32> -> vector<16x128xf32>
    %c0_15 = arith.constant 0 : index
    %22 = memref.load %arg7[%c0_15] : memref<1xf32, #tpu.memory_space<smem>>
    %23 = vector.broadcast %22 : f32 to vector<16x128xf32>
    %24 = arith.addf %21, %23 : vector<16x128xf32>
    %cst_16 = arith.constant 0.000000e+00 : f32
    %25 = vector.broadcast %cst_16 : f32 to vector<16x128xf32>
    %26 = arith.subf %25, %24 : vector<16x128xf32>
    %27 = math.exp %26 : vector<16x128xf32>
    %cst_17 = arith.constant 1.000000e+00 : f32
    %28 = vector.broadcast %cst_17 : f32 to vector<16x128xf32>
    %29 = arith.addf %28, %27 : vector<16x128xf32>
    %cst_18 = arith.constant 1.000000e+00 : f32
    %30 = vector.broadcast %cst_18 : f32 to vector<16x128xf32>
    %31 = arith.divf %30, %29 : vector<16x128xf32>
    %c0_19 = arith.constant 0 : index
    %c0_20 = arith.constant 0 : index
    %32 = vector.load %arg8[%c0_19, %c0_20] : memref<16x128xf32, #tpu.memory_space<vmem>>, vector<16x128xf32>
    tpu.vector_store %arg8[%c0_19, %c0_20], %31 {strides = array<i32>} : memref<16x128xf32, #tpu.memory_space<vmem>>, vector<16x128xf32>,
    return
  }
  func.func @transform_0(%arg0: i32) -> (i32, i32) {
    %c0_i32 = arith.constant 0 : i32
    %c0_i32_0 = arith.constant 0 : i32
    return %arg0, %c0_i32 : i32, i32
  }
  func.func @transform_1(%arg0: i32) -> (i32, i32) {
    %c0_i32 = arith.constant 0 : i32
    %c0_i32_0 = arith.constant 0 : i32
    %c0_i32_1 = arith.constant 0 : i32
    return %c0_i32, %c0_i32_0 : i32, i32
  }
  func.func @transform_2(%arg0: i32) -> (i32, i32) {
    %c0_i32 = arith.constant 0 : i32
    %c0_i32_0 = arith.constant 0 : i32
    %c0_i32_1 = arith.constant 0 : i32
    return %c0_i32, %c0_i32_0 : i32, i32
  }
  func.func @transform_3(%arg0: i32) -> (i32, i32) {
    %c0_i32 = arith.constant 0 : i32
    %c0_i32_0 = arith.constant 0 : i32
    %c0_i32_1 = arith.constant 0 : i32
    return %c0_i32, %c0_i32_0 : i32, i32
  }
  func.func @transform_4(%arg0: i32) -> (i32, i32) {
    %c0_i32 = arith.constant 0 : i32
    %c0_i32_0 = arith.constant 0 : i32
    %c0_i32_1 = arith.constant 0 : i32
    return %c0_i32, %c0_i32_0 : i32, i32
  }
  func.func @transform_5(%arg0: i32) -> (i32, i32) {
    %c0_i32 = arith.constant 0 : i32
    %c0_i32_0 = arith.constant 0 : i32
    %c0_i32_1 = arith.constant 0 : i32
    return %c0_i32, %c0_i32_0 : i32, i32
  }
  func.func @transform_6(%arg0: i32) -> i32 {
    %c0_i32 = arith.constant 0 : i32
    %c0_i32_0 = arith.constant 0 : i32
    return %c0_i32 : i32
  }
  func.func @transform_7(%arg0: i32) -> (i32, i32) {
    %c0_i32 = arith.constant 0 : i32
    %c0_i32_0 = arith.constant 0 : i32
    return %arg0, %c0_i32 : i32, i32
  }
}

</mosaic_0001>

<llo_original>
// kernel: discriminator_forward.1
$region0: #{discriminator_forward.1}
  #allocation0 [shape = 'u32[]', space=smem, size = 0x4, offset = 0x4, fixed_abs, tag = 'smem constant byte address 0x4 - core index']
  #allocation1 [shape = 'u32[72,128]{1,0:T(1,128)}', space=vmem, size = 0x9000, scoped, tag = 'internal scratch']
  #allocation2 [shape = 'f32[1]{0:T(128)S(6)}', space=smem, size = 0x200, scoped, tag = 'scoped memory for discriminator_forward.1']
  %s0 = inlined_call_operand.vmem [shape: f32[16,784], index: 0, kind: input, shape index: {}]
  %s1 = inlined_call_operand.hbm [shape: bf16[784,512], index: 1, kind: input, shape index: {}]
  %s2 = inlined_call_operand.vmem [shape: f32[1,512], index: 2, kind: input, shape index: {}]
  %s3 = inlined_call_operand.vmem [shape: bf16[512,256], index: 3, kind: input, shape index: {}]
  %s4 = inlined_call_operand.vmem [shape: f32[1,256], index: 4, kind: input, shape index: {}]
  %s5 = inlined_call_operand.vmem [shape: bf16[256,128], index: 5, kind: input, shape index: {}]
  %s6 = inlined_call_operand.<no memory space> [shape: f32[1], index: 6, kind: input, shape index: {}]
  %s7 = inlined_call_operand.vmem [shape: f32[16,128], index: 7, kind: output, shape index: {}]
  %s8 = sld [smem:[#allocation0]]
  $region42: #{discriminator_forward.1} parent=0
    _
  %s10 = ssub.s32 1, %s8
  %s11 = scalar_select 0, %s10, %s8
  %12 = sst [smem:[#allocation2]] %s6
  $region1: #{discriminator_forward.1} parent=0
    #allocation3 [shape = 'u8[802816]{0}', space=vmem, size = 0xc4000, scoped, tag = 'input window, operand 1, single buffered']
    #allocation4 [shape = 's32[1]{0}', space=sflag, size = 0x4, scoped, tag = 'scoped memory for discriminator_forward.1']
    %13 = vsyncpa [#allocation4], 0
    // Predicated region
    $region2: #{discriminator_forward.1} parent=1 // pred_check
      _
    $region3: #{discriminator_forward.1} parent=1 // pred_check_branch
      %15 = sbr.rel (0) target = $region5
    $region4: #{discriminator_forward.1} parent=1 // pred_region
      _
    $region5: #{discriminator_forward.1} parent=1 // pred_fallthru
      _
    // Predicated region
    $region6: #{discriminator_forward.1} parent=1 // pred_check
      _
    $region7: #{discriminator_forward.1} parent=1 // pred_check_branch
      %17 = sbr.rel (0) target = $region9
    $region8: #{discriminator_forward.1} parent=1 // pred_region
      %19 = vsyncadd [#allocation4], 0
      %s20 = sshll.u32 %s1, 4
      %s21 = int_to_ptr.hbm [resolvable:$true] %s20
      %s22 = sshll.u32 [#allocation3], 4
      %s23 = int_to_ptr.vmem [resolvable:$true] %s22
      %28 = dma.hbm_to_vmem [thread:$0]  %s21, 25088, %s23, [#allocation4], 256, 256, 16
    $region9: #{discriminator_forward.1} parent=1 // pred_fallthru
      _
    // Predicated region
    $region10: #{discriminator_forward.1} parent=1 // pred_check
      _
    $region11: #{discriminator_forward.1} parent=1 // pred_check_branch
      %30 = sbr.rel (0) target = $region13
    $region12: #{discriminator_forward.1} parent=1 // pred_region
      _
    $region13: #{discriminator_forward.1} parent=1 // pred_fallthru
      _
    // Predicated region
    $region14: #{discriminator_forward.1} parent=1 // pred_check
      _
    $region15: #{discriminator_forward.1} parent=1 // pred_check_branch
      %32 = sbr.rel (0) target = $region17
    $region16: #{discriminator_forward.1} parent=1 // pred_region
      _
    $region17: #{discriminator_forward.1} parent=1 // pred_fallthru
      _
    // Predicated region
    $region18: #{discriminator_forward.1} parent=1 // pred_check
      _
    $region19: #{discriminator_forward.1} parent=1 // pred_check_branch
      %34 = sbr.rel (0) target = $region21
    $region20: #{discriminator_forward.1} parent=1 // pred_region
      _
    $region21: #{discriminator_forward.1} parent=1 // pred_fallthru
      _
    // Predicated region
    $region22: #{discriminator_forward.1} parent=1 // pred_check
      _
    $region23: #{discriminator_forward.1} parent=1 // pred_check_branch
      %36 = sbr.rel (0) target = $region25
    $region24: #{discriminator_forward.1} parent=1 // pred_region
      _
    $region25: #{discriminator_forward.1} parent=1 // pred_fallthru
      _
    // Predicated region
    $region26: #{discriminator_forward.1} parent=1 // pred_check
      _
    $region27: #{discriminator_forward.1} parent=1 // pred_check_branch
      %38 = sbr.rel (0) target = $region29
    $region28: #{discriminator_forward.1} parent=1 // pred_region
      _
    $region29: #{discriminator_forward.1} parent=1 // pred_fallthru
      _
    // Predicated region
    $region30: #{discriminator_forward.1} parent=1 // pred_check
      _
    $region31: #{discriminator_forward.1} parent=1 // pred_check_branch
      %40 = sbr.rel (0) target = $region33
    $region32: #{discriminator_forward.1} parent=1 // pred_region
      %42 = dma.done [#allocation4], 25088
    $region33: #{discriminator_forward.1} parent=1 // pred_fallthru
      _
    %v44 = vld [vmem:[%s0] sm:$0xff]
    %v45 = vld [vmem:[%s0 + $0x8] sm:$0xff]
    %v46 = vld [vmem:[%s0 + $0x10] sm:$0xff]
    %v47 = vld [vmem:[%s0 + $0x18] sm:$0xff]
    %v48 = vld [vmem:[%s0 + $0x20] sm:$0xff]
    %v49 = vld [vmem:[%s0 + $0x28] sm:$0xff]
    %v50 = vld [vmem:[%s0 + $0x30] sm:$0xff]
    %v51 = vld [vmem:[%s0 + $0x38] sm:$0xff]
    %v52 = vld [vmem:[%s0 + $0x40] sm:$0xff]
    %v53 = vld [vmem:[%s0 + $0x48] sm:$0xff]
    %v54 = vld [vmem:[%s0 + $0x50] sm:$0xff]
    %v55 = vld [vmem:[%s0 + $0x58] sm:$0xff]
    %v56 = vld [vmem:[%s0 + $0x60] sm:$0xff]
    %v57 = vld [vmem:[%s0 + $0x68] sm:$0xff]
    %v58 = vpack.c.bf16 %v51, %v44
    %v59 = vpack.c.bf16 %v52, %v45
    %v60 = vpack.c.bf16 %v53, %v46
    %v61 = vpack.c.bf16 %v54, %v47
    %v62 = vpack.c.bf16 %v55, %v48
    %v63 = vpack.c.bf16 %v56, %v49
    %v64 = vpack.c.bf16 %v57, %v50
    %v65 = vld [vmem:[#allocation3] sm:$0xff]
    %v66 = vld [vmem:[#allocation3 + $0x8] sm:$0xff]
    %v67 = vld [vmem:[#allocation3 + $0x10] sm:$0xff]
    %v68 = vld [vmem:[#allocation3 + $0x18] sm:$0xff]
    %v69 = vld [vmem:[#allocation3 + $0x20] sm:$0xff]
    %v70 = vld [vmem:[#allocation3 + $0x28] sm:$0xff]
    %v71 = vld [vmem:[#allocation3 + $0x30] sm:$0xff]
    %v72 = vld [vmem:[#allocation3 + $0x38] sm:$0xff]
    %v73 = vld [vmem:[#allocation3 + $0x40] sm:$0xff]
    %v74 = vld [vmem:[#allocation3 + $0x48] sm:$0xff]
    %v75 = vld [vmem:[#allocation3 + $0x50] sm:$0xff]
    %v76 = vld [vmem:[#allocation3 + $0x58] sm:$0xff]
    %v77 = vld [vmem:[#allocation3 + $0x60] sm:$0xff]
    %v78 = vld [vmem:[#allocation3 + $0x68] sm:$0xff]
    %v79 = vld [vmem:[#allocation3 + $0x70] sm:$0xff]
    %v80 = vld [vmem:[#allocation3 + $0x78] sm:$0xff]
    %v81 = vld [vmem:[#allocation3 + $0x80] sm:$0xff]
    %v82 = vld [vmem:[#allocation3 + $0x88] sm:$0xff]
    %v83 = vld [vmem:[#allocation3 + $0x90] sm:$0xff]
    %v84 = vld [vmem:[#allocation3 + $0x98] sm:$0xff]
    %v85 = vld [vmem:[#allocation3 + $0xa0] sm:$0xff]
    %v86 = vld [vmem:[#allocation3 + $0xa8] sm:$0xff]
    %v87 = vld [vmem:[#allocation3 + $0xb0] sm:$0xff]
    %v88 = vld [vmem:[#allocation3 + $0xb8] sm:$0xff]
    %v89 = vld [vmem:[#allocation3 + $0xc0] sm:$0xff]
    %v90 = vld [vmem:[#allocation3 + $0xc8] sm:$0xff]
    %v91 = vld [vmem:[#allocation3 + $0xd0] sm:$0xff]
    %v92 = vld [vmem:[#allocation3 + $0xd8] sm:$0xff]
    %v93 = vld [vmem:[#allocation3 + $0xe0] sm:$0xff]
    %v94 = vld [vmem:[#allocation3 + $0xe8] sm:$0xff]
    %v95 = vld [vmem:[#allocation3 + $0xf0] sm:$0xff]
    %v96 = vld [vmem:[#allocation3 + $0xf8] sm:$0xff]
    %v97 = vld [vmem:[#allocation3 + $0x100] sm:$0xff]
    %v98 = vld [vmem:[#allocation3 + $0x108] sm:$0xff]
    %v99 = vld [vmem:[#allocation3 + $0x110] sm:$0xff]
    %v100 = vld [vmem:[#allocation3 + $0x118] sm:$0xff]
    %v101 = vld [vmem:[#allocation3 + $0x120] sm:$0xff]
    %v102 = vld [vmem:[#allocation3 + $0x128] sm:$0xff]
    %v103 = vld [vmem:[#allocation3 + $0x130] sm:$0xff]
    %v104 = vld [vmem:[#allocation3 + $0x138] sm:$0xff]
    %v105 = vld [vmem:[#allocation3 + $0x140] sm:$0xff]
    %v106 = vld [vmem:[#allocation3 + $0x148] sm:$0xff]
    %v107 = vld [vmem:[#allocation3 + $0x150] sm:$0xff]
    %v108 = vld [vmem:[#allocation3 + $0x158] sm:$0xff]
    %v109 = vld [vmem:[#allocation3 + $0x160] sm:$0xff]
    %v110 = vld [vmem:[#allocation3 + $0x168] sm:$0xff]
    %v111 = vld [vmem:[#allocation3 + $0x170] sm:$0xff]
    %v112 = vld [vmem:[#allocation3 + $0x178] sm:$0xff]
    %v113 = vld [vmem:[#allocation3 + $0x180] sm:$0xff]
    %v114 = vld [vmem:[#allocation3 + $0x188] sm:$0xff]
    %v115 = vld [vmem:[#allocation3 + $0x190] sm:$0xff]
    %v116 = vld [vmem:[#allocation3 + $0x198] sm:$0xff]
    %v117 = vld [vmem:[#allocation3 + $0x1a0] sm:$0xff]
    %v118 = vld [vmem:[#allocation3 + $0x1a8] sm:$0xff]
    %v119 = vld [vmem:[#allocation3 + $0x1b0] sm:$0xff]
    %v120 = vld [vmem:[#allocation3 + $0x1b8] sm:$0xff]
    %v121 = vld [vmem:[#allocation3 + $0x1c0] sm:$0xff]
    %v122 = vld [vmem:[#allocation3 + $0x1c8] sm:$0xff]
    %v123 = vld [vmem:[#allocation3 + $0x1d0] sm:$0xff]
    %v124 = vld [vmem:[#allocation3 + $0x1d8] sm:$0xff]
    %v125 = vld [vmem:[#allocation3 + $0x1e0] sm:$0xff]
    %v126 = vld [vmem:[#allocation3 + $0x1e8] sm:$0xff]
    %v127 = vld [vmem:[#allocation3 + $0x1f0] sm:$0xff]
    %v128 = vld [vmem:[#allocation3 + $0x1f8] sm:$0xff]
    %v129 = vld [vmem:[#allocation3 + $0x200] sm:$0xff]
    %v130 = vld [vmem:[#allocation3 + $0x208] sm:$0xff]
    %v131 = vld [vmem:[#allocation3 + $0x210] sm:$0xff]
    %v132 = vld [vmem:[#allocation3 + $0x218] sm:$0xff]
    %v133 = vld [vmem:[#allocation3 + $0x220] sm:$0xff]
    %v134 = vld [vmem:[#allocation3 + $0x228] sm:$0xff]
    %v135 = vld [vmem:[#allocation3 + $0x230] sm:$0xff]
    %v136 = vld [vmem:[#allocation3 + $0x238] sm:$0xff]
    %v137 = vld [vmem:[#allocation3 + $0x240] sm:$0xff]
    %v138 = vld [vmem:[#allocation3 + $0x248] sm:$0xff]
    %v139 = vld [vmem:[#allocation3 + $0x250] sm:$0xff]
    %v140 = vld [vmem:[#allocation3 + $0x258] sm:$0xff]
    %v141 = vld [vmem:[#allocation3 + $0x260] sm:$0xff]
    %v142 = vld [vmem:[#allocation3 + $0x268] sm:$0xff]
    %v143 = vld [vmem:[#allocation3 + $0x270] sm:$0xff]
    %v144 = vld [vmem:[#allocation3 + $0x278] sm:$0xff]
    %v145 = vld [vmem:[#allocation3 + $0x280] sm:$0xff]
    %v146 = vld [vmem:[#allocation3 + $0x288] sm:$0xff]
    %v147 = vld [vmem:[#allocation3 + $0x290] sm:$0xff]
    %v148 = vld [vmem:[#allocation3 + $0x298] sm:$0xff]
    %v149 = vld [vmem:[#allocation3 + $0x2a0] sm:$0xff]
    %v150 = vld [vmem:[#allocation3 + $0x2a8] sm:$0xff]
    %v151 = vld [vmem:[#allocation3 + $0x2b0] sm:$0xff]
    %v152 = vld [vmem:[#allocation3 + $0x2b8] sm:$0xff]
    %v153 = vld [vmem:[#allocation3 + $0x2c0] sm:$0xff]
    %v154 = vld [vmem:[#allocation3 + $0x2c8] sm:$0xff]
    %v155 = vld [vmem:[#allocation3 + $0x2d0] sm:$0xff]
    %v156 = vld [vmem:[#allocation3 + $0x2d8] sm:$0xff]
    %v157 = vld [vmem:[#allocation3 + $0x2e0] sm:$0xff]
    %v158 = vld [vmem:[#allocation3 + $0x2e8] sm:$0xff]
    %v159 = vld [vmem:[#allocation3 + $0x2f0] sm:$0xff]
    %v160 = vld [vmem:[#allocation3 + $0x2f8] sm:$0xff]
    %v161 = vld [vmem:[#allocation3 + $0x300] sm:$0xff]
    %v162 = vld [vmem:[#allocation3 + $0x308] sm:$0xff]
    %v163 = vld [vmem:[#allocation3 + $0x310] sm:$0xff]
    %v164 = vld [vmem:[#allocation3 + $0x318] sm:$0xff]
    %v165 = vld [vmem:[#allocation3 + $0x320] sm:$0xff]
    %v166 = vld [vmem:[#allocation3 + $0x328] sm:$0xff]
    %v167 = vld [vmem:[#allocation3 + $0x330] sm:$0xff]
    %v168 = vld [vmem:[#allocation3 + $0x338] sm:$0xff]
    %v169 = vld [vmem:[#allocation3 + $0x340] sm:$0xff]
    %v170 = vld [vmem:[#allocation3 + $0x348] sm:$0xff]
    %v171 = vld [vmem:[#allocation3 + $0x350] sm:$0xff]
    %v172 = vld [vmem:[#allocation3 + $0x358] sm:$0xff]
    %v173 = vld [vmem:[#allocation3 + $0x360] sm:$0xff]
    %v174 = vld [vmem:[#allocation3 + $0x368] sm:$0xff]
    %v175 = vld [vmem:[#allocation3 + $0x370] sm:$0xff]
    %v176 = vld [vmem:[#allocation3 + $0x378] sm:$0xff]
    %v177 = vld [vmem:[#allocation3 + $0x380] sm:$0xff]
    %v178 = vld [vmem:[#allocation3 + $0x388] sm:$0xff]
    %v179 = vld [vmem:[#allocation3 + $0x390] sm:$0xff]
    %v180 = vld [vmem:[#allocation3 + $0x398] sm:$0xff]
    %v181 = vld [vmem:[#allocation3 + $0x3a0] sm:$0xff]
    %v182 = vld [vmem:[#allocation3 + $0x3a8] sm:$0xff]
    %v183 = vld [vmem:[#allocation3 + $0x3b0] sm:$0xff]
    %v184 = vld [vmem:[#allocation3 + $0x3b8] sm:$0xff]
    %v185 = vld [vmem:[#allocation3 + $0x3c0] sm:$0xff]
    %v186 = vld [vmem:[#allocation3 + $0x3c8] sm:$0xff]
    %v187 = vld [vmem:[#allocation3 + $0x3d0] sm:$0xff]
    %v188 = vld [vmem:[#allocation3 + $0x3d8] sm:$0xff]
    %v189 = vld [vmem:[#allocation3 + $0x3e0] sm:$0xff]
    %v190 = vld [vmem:[#allocation3 + $0x3e8] sm:$0xff]
    %v191 = vld [vmem:[#allocation3 + $0x3f0] sm:$0xff]
    %v192 = vld [vmem:[#allocation3 + $0x3f8] sm:$0xff]
    %v193 = vld [vmem:[#allocation3 + $0x400] sm:$0xff]
    %v194 = vld [vmem:[#allocation3 + $0x408] sm:$0xff]
    %v195 = vld [vmem:[#allocation3 + $0x410] sm:$0xff]
    %v196 = vld [vmem:[#allocation3 + $0x418] sm:$0xff]
    %v197 = vld [vmem:[#allocation3 + $0x420] sm:$0xff]
    %v198 = vld [vmem:[#allocation3 + $0x428] sm:$0xff]
    %v199 = vld [vmem:[#allocation3 + $0x430] sm:$0xff]
    %v200 = vld [vmem:[#allocation3 + $0x438] sm:$0xff]
    %v201 = vld [vmem:[#allocation3 + $0x440] sm:$0xff]
    %v202 = vld [vmem:[#allocation3 + $0x448] sm:$0xff]
    %v203 = vld [vmem:[#allocation3 + $0x450] sm:$0xff]
    %v204 = vld [vmem:[#allocation3 + $0x458] sm:$0xff]
    %v205 = vld [vmem:[#allocation3 + $0x460] sm:$0xff]
    %v206 = vld [vmem:[#allocation3 + $0x468] sm:$0xff]
    %v207 = vld [vmem:[#allocation3 + $0x470] sm:$0xff]
    %v208 = vld [vmem:[#allocation3 + $0x478] sm:$0xff]
    %v209 = vld [vmem:[#allocation3 + $0x480] sm:$0xff]
    %v210 = vld [vmem:[#allocation3 + $0x488] sm:$0xff]
    %v211 = vld [vmem:[#allocation3 + $0x490] sm:$0xff]
    %v212 = vld [vmem:[#allocation3 + $0x498] sm:$0xff]
    %v213 = vld [vmem:[#allocation3 + $0x4a0] sm:$0xff]
    %v214 = vld [vmem:[#allocation3 + $0x4a8] sm:$0xff]
    %v215 = vld [vmem:[#allocation3 + $0x4b0] sm:$0xff]
    %v216 = vld [vmem:[#allocation3 + $0x4b8] sm:$0xff]
    %v217 = vld [vmem:[#allocation3 + $0x4c0] sm:$0xff]
    %v218 = vld [vmem:[#allocation3 + $0x4c8] sm:$0xff]
    %v219 = vld [vmem:[#allocation3 + $0x4d0] sm:$0xff]
    %v220 = vld [vmem:[#allocation3 + $0x4d8] sm:$0xff]
    %v221 = vld [vmem:[#allocation3 + $0x4e0] sm:$0xff]
    %v222 = vld [vmem:[#allocation3 + $0x4e8] sm:$0xff]
    %v223 = vld [vmem:[#allocation3 + $0x4f0] sm:$0xff]
    %v224 = vld [vmem:[#allocation3 + $0x4f8] sm:$0xff]
    %v225 = vld [vmem:[#allocation3 + $0x500] sm:$0xff]
    %v226 = vld [vmem:[#allocation3 + $0x508] sm:$0xff]
    %v227 = vld [vmem:[#allocation3 + $0x510] sm:$0xff]
    %v228 = vld [vmem:[#allocation3 + $0x518] sm:$0xff]
    %v229 = vld [vmem:[#allocation3 + $0x520] sm:$0xff]
    %v230 = vld [vmem:[#allocation3 + $0x528] sm:$0xff]
    %v231 = vld [vmem:[#allocation3 + $0x530] sm:$0xff]
    %v232 = vld [vmem:[#allocation3 + $0x538] sm:$0xff]
    %v233 = vld [vmem:[#allocation3 + $0x540] sm:$0xff]
    %v234 = vld [vmem:[#allocation3 + $0x548] sm:$0xff]
    %v235 = vld [vmem:[#allocation3 + $0x550] sm:$0xff]
    %v236 = vld [vmem:[#allocation3 + $0x558] sm:$0xff]
    %v237 = vld [vmem:[#allocation3 + $0x560] sm:$0xff]
    %v238 = vld [vmem:[#allocation3 + $0x568] sm:$0xff]
    %v239 = vld [vmem:[#allocation3 + $0x570] sm:$0xff]
    %v240 = vld [vmem:[#allocation3 + $0x578] sm:$0xff]
    %v241 = vld [vmem:[#allocation3 + $0x580] sm:$0xff]
    %v242 = vld [vmem:[#allocation3 + $0x588] sm:$0xff]
    %v243 = vld [vmem:[#allocation3 + $0x590] sm:$0xff]
    %v244 = vld [vmem:[#allocation3 + $0x598] sm:$0xff]
    %v245 = vld [vmem:[#allocation3 + $0x5a0] sm:$0xff]
    %v246 = vld [vmem:[#allocation3 + $0x5a8] sm:$0xff]
    %v247 = vld [vmem:[#allocation3 + $0x5b0] sm:$0xff]
    %v248 = vld [vmem:[#allocation3 + $0x5b8] sm:$0xff]
    %v249 = vld [vmem:[#allocation3 + $0x5c0] sm:$0xff]
    %v250 = vld [vmem:[#allocation3 + $0x5c8] sm:$0xff]
    %v251 = vld [vmem:[#allocation3 + $0x5d0] sm:$0xff]
    %v252 = vld [vmem:[#allocation3 + $0x5d8] sm:$0xff]
    %v253 = vld [vmem:[#allocation3 + $0x5e0] sm:$0xff]
    %v254 = vld [vmem:[#allocation3 + $0x5e8] sm:$0xff]
    %v255 = vld [vmem:[#allocation3 + $0x5f0] sm:$0xff]
    %v256 = vld [vmem:[#allocation3 + $0x5f8] sm:$0xff]
    %v257 = vld [vmem:[#allocation3 + $0x600] sm:$0xff]
    %v258 = vld [vmem:[#allocation3 + $0x608] sm:$0xff]
    %v259 = vld [vmem:[#allocation3 + $0x610] sm:$0xff]
    %v260 = vld [vmem:[#allocation3 + $0x618] sm:$0xff]
    %v261 = vld [vmem:[%s2] sm:$0xf]
    %v263 = vperm.slane %v261, 0
    %v264 = vperm.slane %v261, 1
    %v265 = vperm.slane %v261, 2
    %v266 = vperm.slane %v261, 3
    %v467 = vunpack.c.l.b16 %v65
    %v468 = vunpack.c.h.b16 %v65
    %v469 = vunpack.c.l.b16 %v66
    %v470 = vunpack.c.h.b16 %v66
    %v471 = vunpack.c.l.b16 %v67
    %v472 = vunpack.c.h.b16 %v67
    %v473 = vunpack.c.l.b16 %v68
    %v474 = vunpack.c.h.b16 %v68
    %v475 = vunpack.c.l.b16 %v69
    %v476 = vunpack.c.h.b16 %v69
    %v477 = vunpack.c.l.b16 %v70
    %v478 = vunpack.c.h.b16 %v70
    %v479 = vunpack.c.l.b16 %v71
    %v480 = vunpack.c.h.b16 %v71
    %v481 = vunpack.c.l.b16 %v72
    %v482 = vunpack.c.h.b16 %v72
    %v483 = vunpack.c.l.b16 %v73
    %v484 = vunpack.c.h.b16 %v73
    %v485 = vunpack.c.l.b16 %v74
    %v486 = vunpack.c.h.b16 %v74
    %v487 = vunpack.c.l.b16 %v75
    %v488 = vunpack.c.h.b16 %v75
    %v489 = vunpack.c.l.b16 %v76
    %v490 = vunpack.c.h.b16 %v76
    %v491 = vunpack.c.l.b16 %v77
    %v492 = vunpack.c.h.b16 %v77
    %v493 = vunpack.c.l.b16 %v78
    %v494 = vunpack.c.h.b16 %v78
    %v495 = vunpack.c.l.b16 %v79
    %v496 = vunpack.c.h.b16 %v79
    %v497 = vunpack.c.l.b16 %v80
    %v498 = vunpack.c.h.b16 %v80
    %v499 = vunpack.c.l.b16 %v81
    %v500 = vunpack.c.h.b16 %v81
    %v501 = vunpack.c.l.b16 %v82
    %v502 = vunpack.c.h.b16 %v82
    %v503 = vunpack.c.l.b16 %v83
    %v504 = vunpack.c.h.b16 %v83
    %v505 = vunpack.c.l.b16 %v84
    %v506 = vunpack.c.h.b16 %v84
    %v507 = vunpack.c.l.b16 %v85
    %v508 = vunpack.c.h.b16 %v85
    %v509 = vunpack.c.l.b16 %v86
    %v510 = vunpack.c.h.b16 %v86
    %v511 = vunpack.c.l.b16 %v87
    %v512 = vunpack.c.h.b16 %v87
    %v513 = vunpack.c.l.b16 %v88
    %v514 = vunpack.c.h.b16 %v88
    %v515 = vunpack.c.l.b16 %v89
    %v516 = vunpack.c.h.b16 %v89
    %v517 = vunpack.c.l.b16 %v90
    %v518 = vunpack.c.h.b16 %v90
    %v519 = vunpack.c.l.b16 %v91
    %v520 = vunpack.c.h.b16 %v91
    %v521 = vunpack.c.l.b16 %v92
    %v522 = vunpack.c.h.b16 %v92
    %v523 = vunpack.c.l.b16 %v93
    %v524 = vunpack.c.h.b16 %v93
    %v525 = vunpack.c.l.b16 %v94
    %v526 = vunpack.c.h.b16 %v94
    %v527 = vunpack.c.l.b16 %v95
    %v528 = vunpack.c.h.b16 %v95
    %v529 = vunpack.c.l.b16 %v96
    %v530 = vunpack.c.h.b16 %v96
    %v531 = vunpack.c.l.b16 %v97
    %v532 = vunpack.c.h.b16 %v97
    %v533 = vunpack.c.l.b16 %v98
    %v534 = vunpack.c.h.b16 %v98
    %v535 = vunpack.c.l.b16 %v99
    %v536 = vunpack.c.h.b16 %v99
    %v537 = vunpack.c.l.b16 %v100
    %v538 = vunpack.c.h.b16 %v100
    %v539 = vunpack.c.l.b16 %v101
    %v540 = vunpack.c.h.b16 %v101
    %v541 = vunpack.c.l.b16 %v102
    %v542 = vunpack.c.h.b16 %v102
    %v543 = vunpack.c.l.b16 %v103
    %v544 = vunpack.c.h.b16 %v103
    %v545 = vunpack.c.l.b16 %v104
    %v546 = vunpack.c.h.b16 %v104
    %v547 = vunpack.c.l.b16 %v105
    %v548 = vunpack.c.h.b16 %v105
    %v549 = vunpack.c.l.b16 %v106
    %v550 = vunpack.c.h.b16 %v106
    %v551 = vunpack.c.l.b16 %v107
    %v552 = vunpack.c.h.b16 %v107
    %v553 = vunpack.c.l.b16 %v108
    %v554 = vunpack.c.h.b16 %v108
    %v555 = vunpack.c.l.b16 %v109
    %v556 = vunpack.c.h.b16 %v109
    %v557 = vunpack.c.l.b16 %v110
    %v558 = vunpack.c.h.b16 %v110
    %v559 = vunpack.c.l.b16 %v111
    %v560 = vunpack.c.h.b16 %v111
    %v561 = vunpack.c.l.b16 %v112
    %v562 = vunpack.c.h.b16 %v112
    %v563 = vunpack.c.l.b16 %v113
    %v564 = vunpack.c.h.b16 %v113
    %v565 = vunpack.c.l.b16 %v114
    %v566 = vunpack.c.h.b16 %v114
    %v567 = vunpack.c.l.b16 %v115
    %v568 = vunpack.c.h.b16 %v115
    %v569 = vunpack.c.l.b16 %v116
    %v570 = vunpack.c.h.b16 %v116
    %v571 = vunpack.c.l.b16 %v117
    %v572 = vunpack.c.h.b16 %v117
    %v573 = vunpack.c.l.b16 %v118
    %v574 = vunpack.c.h.b16 %v118
    %v575 = vunpack.c.l.b16 %v119
    %v576 = vunpack.c.h.b16 %v119
    %v577 = vunpack.c.l.b16 %v120
    %v578 = vunpack.c.h.b16 %v120
    %v579 = vunpack.c.l.b16 %v121
    %v580 = vunpack.c.h.b16 %v121
    %v581 = vunpack.c.l.b16 %v122
    %v582 = vunpack.c.h.b16 %v122
    %v583 = vunpack.c.l.b16 %v123
    %v584 = vunpack.c.h.b16 %v123
    %v585 = vunpack.c.l.b16 %v124
    %v586 = vunpack.c.h.b16 %v124
    %v587 = vunpack.c.l.b16 %v125
    %v588 = vunpack.c.h.b16 %v125
    %v589 = vunpack.c.l.b16 %v126
    %v590 = vunpack.c.h.b16 %v126
    %v591 = vunpack.c.l.b16 %v127
    %v592 = vunpack.c.h.b16 %v127
    %v593 = vunpack.c.l.b16 %v128
    %v594 = vunpack.c.h.b16 %v128
    %v595 = vunpack.c.l.b16 %v129
    %v596 = vunpack.c.h.b16 %v129
    %v597 = vunpack.c.l.b16 %v130
    %v598 = vunpack.c.h.b16 %v130
    %v599 = vunpack.c.l.b16 %v131
    %v600 = vunpack.c.h.b16 %v131
    %v601 = vunpack.c.l.b16 %v132
    %v602 = vunpack.c.h.b16 %v132
    %v603 = vunpack.c.l.b16 %v133
    %v604 = vunpack.c.h.b16 %v133
    %v605 = vunpack.c.l.b16 %v134
    %v606 = vunpack.c.h.b16 %v134
    %v607 = vunpack.c.l.b16 %v135
    %v608 = vunpack.c.h.b16 %v135
    %v609 = vunpack.c.l.b16 %v136
    %v610 = vunpack.c.h.b16 %v136
    %v611 = vunpack.c.l.b16 %v137
    %v612 = vunpack.c.h.b16 %v137
    %v613 = vunpack.c.l.b16 %v138
    %v614 = vunpack.c.h.b16 %v138
    %v615 = vunpack.c.l.b16 %v139
    %v616 = vunpack.c.h.b16 %v139
    %v617 = vunpack.c.l.b16 %v140
    %v618 = vunpack.c.h.b16 %v140
    %v619 = vunpack.c.l.b16 %v141
    %v620 = vunpack.c.h.b16 %v141
    %v621 = vunpack.c.l.b16 %v142
    %v622 = vunpack.c.h.b16 %v142
    %v623 = vunpack.c.l.b16 %v143
    %v624 = vunpack.c.h.b16 %v143
    %v625 = vunpack.c.l.b16 %v144
    %v626 = vunpack.c.h.b16 %v144
    %v627 = vunpack.c.l.b16 %v145
    %v628 = vunpack.c.h.b16 %v145
    %v629 = vunpack.c.l.b16 %v146
    %v630 = vunpack.c.h.b16 %v146
    %v631 = vunpack.c.l.b16 %v147
    %v632 = vunpack.c.h.b16 %v147
    %v633 = vunpack.c.l.b16 %v148
    %v634 = vunpack.c.h.b16 %v148
    %v635 = vunpack.c.l.b16 %v149
    %v636 = vunpack.c.h.b16 %v149
    %v637 = vunpack.c.l.b16 %v150
    %v638 = vunpack.c.h.b16 %v150
    %v639 = vunpack.c.l.b16 %v151
    %v640 = vunpack.c.h.b16 %v151
    %v641 = vunpack.c.l.b16 %v152
    %v642 = vunpack.c.h.b16 %v152
    %v643 = vunpack.c.l.b16 %v153
    %v644 = vunpack.c.h.b16 %v153
    %v645 = vunpack.c.l.b16 %v154
    %v646 = vunpack.c.h.b16 %v154
    %v647 = vunpack.c.l.b16 %v155
    %v648 = vunpack.c.h.b16 %v155
    %v649 = vunpack.c.l.b16 %v156
    %v650 = vunpack.c.h.b16 %v156
    %v651 = vunpack.c.l.b16 %v157
    %v652 = vunpack.c.h.b16 %v157
    %v653 = vunpack.c.l.b16 %v158
    %v654 = vunpack.c.h.b16 %v158
    %v655 = vunpack.c.l.b16 %v159
    %v656 = vunpack.c.h.b16 %v159
    %v657 = vunpack.c.l.b16 %v160
    %v658 = vunpack.c.h.b16 %v160
    %v659 = vunpack.c.l.b16 %v161
    %v660 = vunpack.c.h.b16 %v161
    %v661 = vunpack.c.l.b16 %v162
    %v662 = vunpack.c.h.b16 %v162
    %v663 = vunpack.c.l.b16 %v163
    %v664 = vunpack.c.h.b16 %v163
    %v665 = vunpack.c.l.b16 %v164
    %v666 = vunpack.c.h.b16 %v164
    %v667 = vunpack.c.l.b16 %v165
    %v668 = vunpack.c.h.b16 %v165
    %v669 = vunpack.c.l.b16 %v166
    %v670 = vunpack.c.h.b16 %v166
    %v671 = vunpack.c.l.b16 %v167
    %v672 = vunpack.c.h.b16 %v167
    %v673 = vunpack.c.l.b16 %v168
    %v674 = vunpack.c.h.b16 %v168
    %v675 = vunpack.c.l.b16 %v169
    %v676 = vunpack.c.h.b16 %v169
    %v677 = vunpack.c.l.b16 %v170
    %v678 = vunpack.c.h.b16 %v170
    %v679 = vunpack.c.l.b16 %v171
    %v680 = vunpack.c.h.b16 %v171
    %v681 = vunpack.c.l.b16 %v172
    %v682 = vunpack.c.h.b16 %v172
    %v683 = vunpack.c.l.b16 %v173
    %v684 = vunpack.c.h.b16 %v173
    %v685 = vunpack.c.l.b16 %v174
    %v686 = vunpack.c.h.b16 %v174
    %v687 = vunpack.c.l.b16 %v175
    %v688 = vunpack.c.h.b16 %v175
    %v689 = vunpack.c.l.b16 %v176
    %v690 = vunpack.c.h.b16 %v176
    %v691 = vunpack.c.l.b16 %v177
    %v692 = vunpack.c.h.b16 %v177
    %v693 = vunpack.c.l.b16 %v178
    %v694 = vunpack.c.h.b16 %v178
    %v695 = vunpack.c.l.b16 %v179
    %v696 = vunpack.c.h.b16 %v179
    %v697 = vunpack.c.l.b16 %v180
    %v698 = vunpack.c.h.b16 %v180
    %v699 = vunpack.c.l.b16 %v181
    %v700 = vunpack.c.h.b16 %v181
    %v701 = vunpack.c.l.b16 %v182
    %v702 = vunpack.c.h.b16 %v182
    %v703 = vunpack.c.l.b16 %v183
    %v704 = vunpack.c.h.b16 %v183
    %v705 = vunpack.c.l.b16 %v184
    %v706 = vunpack.c.h.b16 %v184
    %v707 = vunpack.c.l.b16 %v185
    %v708 = vunpack.c.h.b16 %v185
    %v709 = vunpack.c.l.b16 %v186
    %v710 = vunpack.c.h.b16 %v186
    %v711 = vunpack.c.l.b16 %v187
    %v712 = vunpack.c.h.b16 %v187
    %v713 = vunpack.c.l.b16 %v188
    %v714 = vunpack.c.h.b16 %v188
    %v715 = vunpack.c.l.b16 %v189
    %v716 = vunpack.c.h.b16 %v189
    %v717 = vunpack.c.l.b16 %v190
    %v718 = vunpack.c.h.b16 %v190
    %v719 = vunpack.c.l.b16 %v191
    %v720 = vunpack.c.h.b16 %v191
    %v721 = vunpack.c.l.b16 %v192
    %v722 = vunpack.c.h.b16 %v192
    %v723 = vunpack.c.l.b16 %v193
    %v724 = vunpack.c.h.b16 %v193
    %v725 = vunpack.c.l.b16 %v194
    %v726 = vunpack.c.h.b16 %v194
    %v727 = vunpack.c.l.b16 %v195
    %v728 = vunpack.c.h.b16 %v195
    %v729 = vunpack.c.l.b16 %v196
    %v730 = vunpack.c.h.b16 %v196
    %v731 = vunpack.c.l.b16 %v197
    %v732 = vunpack.c.h.b16 %v197
    %v733 = vunpack.c.l.b16 %v198
    %v734 = vunpack.c.h.b16 %v198
    %v735 = vunpack.c.l.b16 %v199
    %v736 = vunpack.c.h.b16 %v199
    %v737 = vunpack.c.l.b16 %v200
    %v738 = vunpack.c.h.b16 %v200
    %v739 = vunpack.c.l.b16 %v201
    %v740 = vunpack.c.h.b16 %v201
    %v741 = vunpack.c.l.b16 %v202
    %v742 = vunpack.c.h.b16 %v202
    %v743 = vunpack.c.l.b16 %v203
    %v744 = vunpack.c.h.b16 %v203
    %v745 = vunpack.c.l.b16 %v204
    %v746 = vunpack.c.h.b16 %v204
    %v747 = vunpack.c.l.b16 %v205
    %v748 = vunpack.c.h.b16 %v205
    %v749 = vunpack.c.l.b16 %v206
    %v750 = vunpack.c.h.b16 %v206
    %v751 = vunpack.c.l.b16 %v207
    %v752 = vunpack.c.h.b16 %v207
    %v753 = vunpack.c.l.b16 %v208
    %v754 = vunpack.c.h.b16 %v208
    %v755 = vunpack.c.l.b16 %v209
    %v756 = vunpack.c.h.b16 %v209
    %v757 = vunpack.c.l.b16 %v210
    %v758 = vunpack.c.h.b16 %v210
    %v759 = vunpack.c.l.b16 %v211
    %v760 = vunpack.c.h.b16 %v211
    %v761 = vunpack.c.l.b16 %v212
    %v762 = vunpack.c.h.b16 %v212
    %v763 = vunpack.c.l.b16 %v213
    %v764 = vunpack.c.h.b16 %v213
    %v765 = vunpack.c.l.b16 %v214
    %v766 = vunpack.c.h.b16 %v214
    %v767 = vunpack.c.l.b16 %v215
    %v768 = vunpack.c.h.b16 %v215
    %v769 = vunpack.c.l.b16 %v216
    %v770 = vunpack.c.h.b16 %v216
    %v771 = vunpack.c.l.b16 %v217
    %v772 = vunpack.c.h.b16 %v217
    %v773 = vunpack.c.l.b16 %v218
    %v774 = vunpack.c.h.b16 %v218
    %v775 = vunpack.c.l.b16 %v219
    %v776 = vunpack.c.h.b16 %v219
    %v777 = vunpack.c.l.b16 %v220
    %v778 = vunpack.c.h.b16 %v220
    %v779 = vunpack.c.l.b16 %v221
    %v780 = vunpack.c.h.b16 %v221
    %v781 = vunpack.c.l.b16 %v222
    %v782 = vunpack.c.h.b16 %v222
    %v783 = vunpack.c.l.b16 %v223
    %v784 = vunpack.c.h.b16 %v223
    %v785 = vunpack.c.l.b16 %v224
    %v786 = vunpack.c.h.b16 %v224
    %v787 = vunpack.c.l.b16 %v225
    %v788 = vunpack.c.h.b16 %v225
    %v789 = vunpack.c.l.b16 %v226
    %v790 = vunpack.c.h.b16 %v226
    %v791 = vunpack.c.l.b16 %v227
    %v792 = vunpack.c.h.b16 %v227
    %v793 = vunpack.c.l.b16 %v228
    %v794 = vunpack.c.h.b16 %v228
    %v795 = vunpack.c.l.b16 %v229
    %v796 = vunpack.c.h.b16 %v229
    %v797 = vunpack.c.l.b16 %v230
    %v798 = vunpack.c.h.b16 %v230
    %v799 = vunpack.c.l.b16 %v231
    %v800 = vunpack.c.h.b16 %v231
    %v801 = vunpack.c.l.b16 %v232
    %v802 = vunpack.c.h.b16 %v232
    %v803 = vunpack.c.l.b16 %v233
    %v804 = vunpack.c.h.b16 %v233
    %v805 = vunpack.c.l.b16 %v234
    %v806 = vunpack.c.h.b16 %v234
    %v807 = vunpack.c.l.b16 %v235
    %v808 = vunpack.c.h.b16 %v235
    %v809 = vunpack.c.l.b16 %v236
    %v810 = vunpack.c.h.b16 %v236
    %v811 = vunpack.c.l.b16 %v237
    %v812 = vunpack.c.h.b16 %v237
    %v813 = vunpack.c.l.b16 %v238
    %v814 = vunpack.c.h.b16 %v238
    %v815 = vunpack.c.l.b16 %v239
    %v816 = vunpack.c.h.b16 %v239
    %v817 = vunpack.c.l.b16 %v240
    %v818 = vunpack.c.h.b16 %v240
    %v819 = vunpack.c.l.b16 %v241
    %v820 = vunpack.c.h.b16 %v241
    %v821 = vunpack.c.l.b16 %v242
    %v822 = vunpack.c.h.b16 %v242
    %v823 = vunpack.c.l.b16 %v243
    %v824 = vunpack.c.h.b16 %v243
    %v825 = vunpack.c.l.b16 %v244
    %v826 = vunpack.c.h.b16 %v244
    %v827 = vunpack.c.l.b16 %v245
    %v828 = vunpack.c.h.b16 %v245
    %v829 = vunpack.c.l.b16 %v246
    %v830 = vunpack.c.h.b16 %v246
    %v831 = vunpack.c.l.b16 %v247
    %v832 = vunpack.c.h.b16 %v247
    %v833 = vunpack.c.l.b16 %v248
    %v834 = vunpack.c.h.b16 %v248
    %v835 = vunpack.c.l.b16 %v249
    %v836 = vunpack.c.h.b16 %v249
    %v837 = vunpack.c.l.b16 %v250
    %v838 = vunpack.c.h.b16 %v250
    %v839 = vunpack.c.l.b16 %v251
    %v840 = vunpack.c.h.b16 %v251
    %v841 = vunpack.c.l.b16 %v252
    %v842 = vunpack.c.h.b16 %v252
    %v843 = vunpack.c.l.b16 %v253
    %v844 = vunpack.c.h.b16 %v253
    %v845 = vunpack.c.l.b16 %v254
    %v846 = vunpack.c.h.b16 %v254
    %v847 = vunpack.c.l.b16 %v255
    %v848 = vunpack.c.h.b16 %v255
    %v849 = vunpack.c.l.b16 %v256
    %v850 = vunpack.c.h.b16 %v256
    %v851 = vunpack.c.l.b16 %v257
    %v852 = vunpack.c.h.b16 %v257
    %v853 = vunpack.c.l.b16 %v258
    %v854 = vunpack.c.h.b16 %v258
    %v855 = vunpack.c.l.b16 %v259
    %v856 = vunpack.c.h.b16 %v259
    %v857 = vunpack.c.l.b16 %v260
    %v858 = vunpack.c.h.b16 %v260
    %v859 = vpack.c.b16 %v471, %v467
    %v860 = vpack.c.b16 %v472, %v468
    %v861 = vpack.c.b16 %v473, %v469
    %v862 = vpack.c.b16 %v474, %v470
    %v863 = vpack.c.b16 %v479, %v475
    %v864 = vpack.c.b16 %v480, %v476
    %v865 = vpack.c.b16 %v481, %v477
    %v866 = vpack.c.b16 %v482, %v478
    %v867 = vpack.c.b16 %v487, %v483
    %v868 = vpack.c.b16 %v488, %v484
    %v869 = vpack.c.b16 %v489, %v485
    %v870 = vpack.c.b16 %v490, %v486
    %v871 = vpack.c.b16 %v495, %v491
    %v872 = vpack.c.b16 %v496, %v492
    %v873 = vpack.c.b16 %v497, %v493
    %v874 = vpack.c.b16 %v498, %v494
    %v875 = vpack.c.b16 %v503, %v499
    %v876 = vpack.c.b16 %v504, %v500
    %v877 = vpack.c.b16 %v505, %v501
    %v878 = vpack.c.b16 %v506, %v502
    %v879 = vpack.c.b16 %v511, %v507
    %v880 = vpack.c.b16 %v512, %v508
    %v881 = vpack.c.b16 %v513, %v509
    %v882 = vpack.c.b16 %v514, %v510
    %v883 = vpack.c.b16 %v519, %v515
    %v884 = vpack.c.b16 %v520, %v516
    %v885 = vpack.c.b16 %v521, %v517
    %v886 = vpack.c.b16 %v522, %v518
    %v887 = vpack.c.b16 %v527, %v523
    %v888 = vpack.c.b16 %v528, %v524
    %v889 = vpack.c.b16 %v529, %v525
    %v890 = vpack.c.b16 %v530, %v526
    %v891 = vpack.c.b16 %v535, %v531
    %v892 = vpack.c.b16 %v536, %v532
    %v893 = vpack.c.b16 %v537, %v533
    %v894 = vpack.c.b16 %v538, %v534
    %v895 = vpack.c.b16 %v543, %v539
    %v896 = vpack.c.b16 %v544, %v540
    %v897 = vpack.c.b16 %v545, %v541
    %v898 = vpack.c.b16 %v546, %v542
    %v899 = vpack.c.b16 %v551, %v547
    %v900 = vpack.c.b16 %v552, %v548
    %v901 = vpack.c.b16 %v553, %v549
    %v902 = vpack.c.b16 %v554, %v550
    %v903 = vpack.c.b16 %v559, %v555
    %v904 = vpack.c.b16 %v560, %v556
    %v905 = vpack.c.b16 %v561, %v557
    %v906 = vpack.c.b16 %v562, %v558
    %v907 = vpack.c.b16 %v567, %v563
    %v908 = vpack.c.b16 %v568, %v564
    %v909 = vpack.c.b16 %v569, %v565
    %v910 = vpack.c.b16 %v570, %v566
    %v911 = vpack.c.b16 %v575, %v571
    %v912 = vpack.c.b16 %v576, %v572
    %v913 = vpack.c.b16 %v577, %v573
    %v914 = vpack.c.b16 %v578, %v574
    %v915 = vpack.c.b16 %v583, %v579
    %v916 = vpack.c.b16 %v584, %v580
    %v917 = vpack.c.b16 %v585, %v581
    %v918 = vpack.c.b16 %v586, %v582
    %v919 = vpack.c.b16 %v591, %v587
    %v920 = vpack.c.b16 %v592, %v588
    %v921 = vpack.c.b16 %v593, %v589
    %v922 = vpack.c.b16 %v594, %v590
    %v923 = vpack.c.b16 %v599, %v595
    %v924 = vpack.c.b16 %v600, %v596
    %v925 = vpack.c.b16 %v601, %v597
    %v926 = vpack.c.b16 %v602, %v598
    %v927 = vpack.c.b16 %v607, %v603
    %v928 = vpack.c.b16 %v608, %v604
    %v929 = vpack.c.b16 %v609, %v605
    %v930 = vpack.c.b16 %v610, %v606
    %v931 = vpack.c.b16 %v615, %v611
    %v932 = vpack.c.b16 %v616, %v612
    %v933 = vpack.c.b16 %v617, %v613
    %v934 = vpack.c.b16 %v618, %v614
    %v935 = vpack.c.b16 %v623, %v619
    %v936 = vpack.c.b16 %v624, %v620
    %v937 = vpack.c.b16 %v625, %v621
    %v938 = vpack.c.b16 %v626, %v622
    %v939 = vpack.c.b16 %v631, %v627
    %v940 = vpack.c.b16 %v632, %v628
    %v941 = vpack.c.b16 %v633, %v629
    %v942 = vpack.c.b16 %v634, %v630
    %v943 = vpack.c.b16 %v639, %v635
    %v944 = vpack.c.b16 %v640, %v636
    %v945 = vpack.c.b16 %v641, %v637
    %v946 = vpack.c.b16 %v642, %v638
    %v947 = vpack.c.b16 %v647, %v643
    %v948 = vpack.c.b16 %v648, %v644
    %v949 = vpack.c.b16 %v649, %v645
    %v950 = vpack.c.b16 %v650, %v646
    %v951 = vpack.c.b16 %v655, %v651
    %v952 = vpack.c.b16 %v656, %v652
    %v953 = vpack.c.b16 %v657, %v653
    %v954 = vpack.c.b16 %v658, %v654
    %v955 = vpack.c.b16 %v663, %v659
    %v956 = vpack.c.b16 %v664, %v660
    %v957 = vpack.c.b16 %v665, %v661
    %v958 = vpack.c.b16 %v666, %v662
    %v959 = vpack.c.b16 %v671, %v667
    %v960 = vpack.c.b16 %v672, %v668
    %v961 = vpack.c.b16 %v673, %v669
    %v962 = vpack.c.b16 %v674, %v670
    %v963 = vpack.c.b16 %v679, %v675
    %v964 = vpack.c.b16 %v680, %v676
    %v965 = vpack.c.b16 %v681, %v677
    %v966 = vpack.c.b16 %v682, %v678
    %v967 = vpack.c.b16 %v687, %v683
    %v968 = vpack.c.b16 %v688, %v684
    %v969 = vpack.c.b16 %v689, %v685
    %v970 = vpack.c.b16 %v690, %v686
    %v971 = vpack.c.b16 %v695, %v691
    %v972 = vpack.c.b16 %v696, %v692
    %v973 = vpack.c.b16 %v697, %v693
    %v974 = vpack.c.b16 %v698, %v694
    %v975 = vpack.c.b16 %v703, %v699
    %v976 = vpack.c.b16 %v704, %v700
    %v977 = vpack.c.b16 %v705, %v701
    %v978 = vpack.c.b16 %v706, %v702
    %v979 = vpack.c.b16 %v711, %v707
    %v980 = vpack.c.b16 %v712, %v708
    %v981 = vpack.c.b16 %v713, %v709
    %v982 = vpack.c.b16 %v714, %v710
    %v983 = vpack.c.b16 %v719, %v715
    %v984 = vpack.c.b16 %v720, %v716
    %v985 = vpack.c.b16 %v721, %v717
    %v986 = vpack.c.b16 %v722, %v718
    %v987 = vpack.c.b16 %v727, %v723
    %v988 = vpack.c.b16 %v728, %v724
    %v989 = vpack.c.b16 %v729, %v725
    %v990 = vpack.c.b16 %v730, %v726
    %v991 = vpack.c.b16 %v735, %v731
    %v992 = vpack.c.b16 %v736, %v732
    %v993 = vpack.c.b16 %v737, %v733
    %v994 = vpack.c.b16 %v738, %v734
    %v995 = vpack.c.b16 %v743, %v739
    %v996 = vpack.c.b16 %v744, %v740
    %v997 = vpack.c.b16 %v745, %v741
    %v998 = vpack.c.b16 %v746, %v742
    %v999 = vpack.c.b16 %v751, %v747
    %v1000 = vpack.c.b16 %v752, %v748
    %v1001 = vpack.c.b16 %v753, %v749
    %v1002 = vpack.c.b16 %v754, %v750
    %v1003 = vpack.c.b16 %v759, %v755
    %v1004 = vpack.c.b16 %v760, %v756
    %v1005 = vpack.c.b16 %v761, %v757
    %v1006 = vpack.c.b16 %v762, %v758
    %v1007 = vpack.c.b16 %v767, %v763
    %v1008 = vpack.c.b16 %v768, %v764
    %v1009 = vpack.c.b16 %v769, %v765
    %v1010 = vpack.c.b16 %v770, %v766
    %v1011 = vpack.c.b16 %v775, %v771
    %v1012 = vpack.c.b16 %v776, %v772
    %v1013 = vpack.c.b16 %v777, %v773
    %v1014 = vpack.c.b16 %v778, %v774
    %v1015 = vpack.c.b16 %v783, %v779
    %v1016 = vpack.c.b16 %v784, %v780
    %v1017 = vpack.c.b16 %v785, %v781
    %v1018 = vpack.c.b16 %v786, %v782
    %v1019 = vpack.c.b16 %v791, %v787
    %v1020 = vpack.c.b16 %v792, %v788
    %v1021 = vpack.c.b16 %v793, %v789
    %v1022 = vpack.c.b16 %v794, %v790
    %v1023 = vpack.c.b16 %v799, %v795
    %v1024 = vpack.c.b16 %v800, %v796
    %v1025 = vpack.c.b16 %v801, %v797
    %v1026 = vpack.c.b16 %v802, %v798
    %v1027 = vpack.c.b16 %v807, %v803
    %v1028 = vpack.c.b16 %v808, %v804
    %v1029 = vpack.c.b16 %v809, %v805
    %v1030 = vpack.c.b16 %v810, %v806
    %v1031 = vpack.c.b16 %v815, %v811
    %v1032 = vpack.c.b16 %v816, %v812
    %v1033 = vpack.c.b16 %v817, %v813
    %v1034 = vpack.c.b16 %v818, %v814
    %v1035 = vpack.c.b16 %v823, %v819
    %v1036 = vpack.c.b16 %v824, %v820
    %v1037 = vpack.c.b16 %v825, %v821
    %v1038 = vpack.c.b16 %v826, %v822
    %v1039 = vpack.c.b16 %v831, %v827
    %v1040 = vpack.c.b16 %v832, %v828
    %v1041 = vpack.c.b16 %v833, %v829
    %v1042 = vpack.c.b16 %v834, %v830
    %v1043 = vpack.c.b16 %v839, %v835
    %v1044 = vpack.c.b16 %v840, %v836
    %v1045 = vpack.c.b16 %v841, %v837
    %v1046 = vpack.c.b16 %v842, %v838
    %v1047 = vpack.c.b16 %v847, %v843
    %v1048 = vpack.c.b16 %v848, %v844
    %v1049 = vpack.c.b16 %v849, %v845
    %v1050 = vpack.c.b16 %v850, %v846
    %v1051 = vpack.c.b16 %v855, %v851
    %v1052 = vpack.c.b16 %v856, %v852
    %v1053 = vpack.c.b16 %v857, %v853
    %v1054 = vpack.c.b16 %v858, %v854
    %vm1251 = vcmask 130048
    %v1253 = vsel %vm1251, %v64, 0
    %1255 = vmatpush.bf16.msra.mxu0 %v887
    %1256 = vmatpush.bf16.msra.mxu0 %v883
    %1257 = vmatpush.bf16.msra.mxu0 %v879
    %1258 = vmatpush.bf16.msra.mxu0 %v875
    %1259 = vmatpush.bf16.msra.mxu0 %v871
    %1260 = vmatpush.bf16.msra.mxu0 %v867
    %1261 = vmatpush.bf16.msra.mxu0 %v863
    %1262 = vmatpush.bf16.msra.mxu0 %v859
    %1263 = vmatmul.bf16.gmra.mxu0 %v58
    %v1264 = vpop.f32.mrf.mxu0
    %v1265 = vadd.f32 %v263, %v1264
    %v1266 = vpop.f32.mrf.mxu0
    %v1267 = vadd.f32 %v263, %v1266
    %1268 = vdwg.mxu0
    %1269 = vmatpush.bf16.msra.mxu0 %v919
    %1270 = vmatpush.bf16.msra.mxu0 %v915
    %1271 = vmatpush.bf16.msra.mxu0 %v911
    %1272 = vmatpush.bf16.msra.mxu0 %v907
    %1273 = vmatpush.bf16.msra.mxu0 %v903
    %1274 = vmatpush.bf16.msra.mxu0 %v899
    %1275 = vmatpush.bf16.msra.mxu0 %v895
    %1276 = vmatpush.bf16.msra.mxu0 %v891
    %1277 = vmatmul.bf16.gmra.mxu0 %v59
    %v1278 = vpop.f32.mrf.mxu0
    %v1279 = vadd.f32 %v1265, %v1278
    %v1280 = vpop.f32.mrf.mxu0
    %v1281 = vadd.f32 %v1267, %v1280
    %1282 = vdwg.mxu0
    %1283 = vmatpush.bf16.msra.mxu0 %v951
    %1284 = vmatpush.bf16.msra.mxu0 %v947
    %1285 = vmatpush.bf16.msra.mxu0 %v943
    %1286 = vmatpush.bf16.msra.mxu0 %v939
    %1287 = vmatpush.bf16.msra.mxu0 %v935
    %1288 = vmatpush.bf16.msra.mxu0 %v931
    %1289 = vmatpush.bf16.msra.mxu0 %v927
    %1290 = vmatpush.bf16.msra.mxu0 %v923
    %1291 = vmatmul.bf16.gmra.mxu0 %v60
    %v1292 = vpop.f32.mrf.mxu0
    %v1293 = vadd.f32 %v1279, %v1292
    %v1294 = vpop.f32.mrf.mxu0
    %v1295 = vadd.f32 %v1281, %v1294
    %1296 = vdwg.mxu0
    %1297 = vmatpush.bf16.msra.mxu0 %v983
    %1298 = vmatpush.bf16.msra.mxu0 %v979
    %1299 = vmatpush.bf16.msra.mxu0 %v975
    %1300 = vmatpush.bf16.msra.mxu0 %v971
    %1301 = vmatpush.bf16.msra.mxu0 %v967
    %1302 = vmatpush.bf16.msra.mxu0 %v963
    %1303 = vmatpush.bf16.msra.mxu0 %v959
    %1304 = vmatpush.bf16.msra.mxu0 %v955
    %1305 = vmatmul.bf16.gmra.mxu0 %v61
    %v1306 = vpop.f32.mrf.mxu0
    %v1307 = vadd.f32 %v1293, %v1306
    %v1308 = vpop.f32.mrf.mxu0
    %v1309 = vadd.f32 %v1295, %v1308
    %1310 = vdwg.mxu0
    %1311 = vmatpush.bf16.msra.mxu0 %v1015
    %1312 = vmatpush.bf16.msra.mxu0 %v1011
    %1313 = vmatpush.bf16.msra.mxu0 %v1007
    %1314 = vmatpush.bf16.msra.mxu0 %v1003
    %1315 = vmatpush.bf16.msra.mxu0 %v999
    %1316 = vmatpush.bf16.msra.mxu0 %v995
    %1317 = vmatpush.bf16.msra.mxu0 %v991
    %1318 = vmatpush.bf16.msra.mxu0 %v987
    %1319 = vmatmul.bf16.gmra.mxu0 %v62
    %v1320 = vpop.f32.mrf.mxu0
    %v1321 = vadd.f32 %v1307, %v1320
    %v1322 = vpop.f32.mrf.mxu0
    %v1323 = vadd.f32 %v1309, %v1322
    %1324 = vdwg.mxu0
    %1325 = vmatpush.bf16.msra.mxu0 %v1047
    %1326 = vmatpush.bf16.msra.mxu0 %v1043
    %1327 = vmatpush.bf16.msra.mxu0 %v1039
    %1328 = vmatpush.bf16.msra.mxu0 %v1035
    %1329 = vmatpush.bf16.msra.mxu0 %v1031
    %1330 = vmatpush.bf16.msra.mxu0 %v1027
    %1331 = vmatpush.bf16.msra.mxu0 %v1023
    %1332 = vmatpush.bf16.msra.mxu0 %v1019
    %1333 = vmatmul.bf16.gmra.mxu0 %v63
    %v1334 = vpop.f32.mrf.mxu0
    %v1335 = vadd.f32 %v1321, %v1334
    %v1336 = vpop.f32.mrf.mxu0
    %v1337 = vadd.f32 %v1323, %v1336
    %1338 = vdwg.mxu0
    %1339 = vmatpush.bf16.msra.mxu0 0
    %1340 = vmatpush.bf16.msra.mxu0 0
    %1341 = vmatpush.bf16.msra.mxu0 0
    %1342 = vmatpush.bf16.msra.mxu0 0
    %1343 = vmatpush.bf16.msra.mxu0 0
    %1344 = vmatpush.bf16.msra.mxu0 0
    %1345 = vmatpush.bf16.msra.mxu0 0
    %1346 = vmatpush.bf16.msra.mxu0 %v1051
    %1347 = vmatmul.bf16.gmra.mxu0 %v1253
    %v1348 = vpop.f32.mrf.mxu0
    %v1349 = vadd.f32 %v1335, %v1348
    %v1350 = vpop.f32.mrf.mxu0
    %v1351 = vadd.f32 %v1337, %v1350
    %1352 = vdwg.mxu0
    %1353 = vmatpush.bf16.msra.mxu0 %v888
    %1354 = vmatpush.bf16.msra.mxu0 %v884
    %1355 = vmatpush.bf16.msra.mxu0 %v880
    %1356 = vmatpush.bf16.msra.mxu0 %v876
    %1357 = vmatpush.bf16.msra.mxu0 %v872
    %1358 = vmatpush.bf16.msra.mxu0 %v868
    %1359 = vmatpush.bf16.msra.mxu0 %v864
    %1360 = vmatpush.bf16.msra.mxu0 %v860
    %1361 = vmatmul.bf16.gmra.mxu0 %v58
    %v1362 = vpop.f32.mrf.mxu0
    %v1363 = vadd.f32 %v264, %v1362
    %v1364 = vpop.f32.mrf.mxu0
    %v1365 = vadd.f32 %v264, %v1364
    %1366 = vdwg.mxu0
    %1367 = vmatpush.bf16.msra.mxu0 %v920
    %1368 = vmatpush.bf16.msra.mxu0 %v916
    %1369 = vmatpush.bf16.msra.mxu0 %v912
    %1370 = vmatpush.bf16.msra.mxu0 %v908
    %1371 = vmatpush.bf16.msra.mxu0 %v904
    %1372 = vmatpush.bf16.msra.mxu0 %v900
    %1373 = vmatpush.bf16.msra.mxu0 %v896
    %1374 = vmatpush.bf16.msra.mxu0 %v892
    %1375 = vmatmul.bf16.gmra.mxu0 %v59
    %v1376 = vpop.f32.mrf.mxu0
    %v1377 = vadd.f32 %v1363, %v1376
    %v1378 = vpop.f32.mrf.mxu0
    %v1379 = vadd.f32 %v1365, %v1378
    %1380 = vdwg.mxu0
    %1381 = vmatpush.bf16.msra.mxu0 %v952
    %1382 = vmatpush.bf16.msra.mxu0 %v948
    %1383 = vmatpush.bf16.msra.mxu0 %v944
    %1384 = vmatpush.bf16.msra.mxu0 %v940
    %1385 = vmatpush.bf16.msra.mxu0 %v936
    %1386 = vmatpush.bf16.msra.mxu0 %v932
    %1387 = vmatpush.bf16.msra.mxu0 %v928
    %1388 = vmatpush.bf16.msra.mxu0 %v924
    %1389 = vmatmul.bf16.gmra.mxu0 %v60
    %v1390 = vpop.f32.mrf.mxu0
    %v1391 = vadd.f32 %v1377, %v1390
    %v1392 = vpop.f32.mrf.mxu0
    %v1393 = vadd.f32 %v1379, %v1392
    %1394 = vdwg.mxu0
    %1395 = vmatpush.bf16.msra.mxu0 %v984
    %1396 = vmatpush.bf16.msra.mxu0 %v980
    %1397 = vmatpush.bf16.msra.mxu0 %v976
    %1398 = vmatpush.bf16.msra.mxu0 %v972
    %1399 = vmatpush.bf16.msra.mxu0 %v968
    %1400 = vmatpush.bf16.msra.mxu0 %v964
    %1401 = vmatpush.bf16.msra.mxu0 %v960
    %1402 = vmatpush.bf16.msra.mxu0 %v956
    %1403 = vmatmul.bf16.gmra.mxu0 %v61
    %v1404 = vpop.f32.mrf.mxu0
    %v1405 = vadd.f32 %v1391, %v1404
    %v1406 = vpop.f32.mrf.mxu0
    %v1407 = vadd.f32 %v1393, %v1406
    %1408 = vdwg.mxu0
    %1409 = vmatpush.bf16.msra.mxu0 %v1016
    %1410 = vmatpush.bf16.msra.mxu0 %v1012
    %1411 = vmatpush.bf16.msra.mxu0 %v1008
    %1412 = vmatpush.bf16.msra.mxu0 %v1004
    %1413 = vmatpush.bf16.msra.mxu0 %v1000
    %1414 = vmatpush.bf16.msra.mxu0 %v996
    %1415 = vmatpush.bf16.msra.mxu0 %v992
    %1416 = vmatpush.bf16.msra.mxu0 %v988
    %1417 = vmatmul.bf16.gmra.mxu0 %v62
    %v1418 = vpop.f32.mrf.mxu0
    %v1419 = vadd.f32 %v1405, %v1418
    %v1420 = vpop.f32.mrf.mxu0
    %v1421 = vadd.f32 %v1407, %v1420
    %1422 = vdwg.mxu0
    %1423 = vmatpush.bf16.msra.mxu0 %v1048
    %1424 = vmatpush.bf16.msra.mxu0 %v1044
    %1425 = vmatpush.bf16.msra.mxu0 %v1040
    %1426 = vmatpush.bf16.msra.mxu0 %v1036
    %1427 = vmatpush.bf16.msra.mxu0 %v1032
    %1428 = vmatpush.bf16.msra.mxu0 %v1028
    %1429 = vmatpush.bf16.msra.mxu0 %v1024
    %1430 = vmatpush.bf16.msra.mxu0 %v1020
    %1431 = vmatmul.bf16.gmra.mxu0 %v63
    %v1432 = vpop.f32.mrf.mxu0
    %v1433 = vadd.f32 %v1419, %v1432
    %v1434 = vpop.f32.mrf.mxu0
    %v1435 = vadd.f32 %v1421, %v1434
    %1436 = vdwg.mxu0
    %1437 = vmatpush.bf16.msra.mxu0 0
    %1438 = vmatpush.bf16.msra.mxu0 0
    %1439 = vmatpush.bf16.msra.mxu0 0
    %1440 = vmatpush.bf16.msra.mxu0 0
    %1441 = vmatpush.bf16.msra.mxu0 0
    %1442 = vmatpush.bf16.msra.mxu0 0
    %1443 = vmatpush.bf16.msra.mxu0 0
    %1444 = vmatpush.bf16.msra.mxu0 %v1052
    %1445 = vmatmul.bf16.gmra.mxu0 %v1253
    %v1446 = vpop.f32.mrf.mxu0
    %v1447 = vadd.f32 %v1433, %v1446
    %v1448 = vpop.f32.mrf.mxu0
    %v1449 = vadd.f32 %v1435, %v1448
    %1450 = vdwg.mxu0
    %1451 = vmatpush.bf16.msra.mxu0 %v889
    %1452 = vmatpush.bf16.msra.mxu0 %v885
    %1453 = vmatpush.bf16.msra.mxu0 %v881
    %1454 = vmatpush.bf16.msra.mxu0 %v877
    %1455 = vmatpush.bf16.msra.mxu0 %v873
    %1456 = vmatpush.bf16.msra.mxu0 %v869
    %1457 = vmatpush.bf16.msra.mxu0 %v865
    %1458 = vmatpush.bf16.msra.mxu0 %v861
    %1459 = vmatmul.bf16.gmra.mxu0 %v58
    %v1460 = vpop.f32.mrf.mxu0
    %v1461 = vadd.f32 %v265, %v1460
    %v1462 = vpop.f32.mrf.mxu0
    %v1463 = vadd.f32 %v265, %v1462
    %1464 = vdwg.mxu0
    %1465 = vmatpush.bf16.msra.mxu0 %v921
    %1466 = vmatpush.bf16.msra.mxu0 %v917
    %1467 = vmatpush.bf16.msra.mxu0 %v913
    %1468 = vmatpush.bf16.msra.mxu0 %v909
    %1469 = vmatpush.bf16.msra.mxu0 %v905
    %1470 = vmatpush.bf16.msra.mxu0 %v901
    %1471 = vmatpush.bf16.msra.mxu0 %v897
    %1472 = vmatpush.bf16.msra.mxu0 %v893
    %1473 = vmatmul.bf16.gmra.mxu0 %v59
    %v1474 = vpop.f32.mrf.mxu0
    %v1475 = vadd.f32 %v1461, %v1474
    %v1476 = vpop.f32.mrf.mxu0
    %v1477 = vadd.f32 %v1463, %v1476
    %1478 = vdwg.mxu0
    %1479 = vmatpush.bf16.msra.mxu0 %v953
    %1480 = vmatpush.bf16.msra.mxu0 %v949
    %1481 = vmatpush.bf16.msra.mxu0 %v945
    %1482 = vmatpush.bf16.msra.mxu0 %v941
    %1483 = vmatpush.bf16.msra.mxu0 %v937
    %1484 = vmatpush.bf16.msra.mxu0 %v933
    %1485 = vmatpush.bf16.msra.mxu0 %v929
    %1486 = vmatpush.bf16.msra.mxu0 %v925
    %1487 = vmatmul.bf16.gmra.mxu0 %v60
    %v1488 = vpop.f32.mrf.mxu0
    %v1489 = vadd.f32 %v1475, %v1488
    %v1490 = vpop.f32.mrf.mxu0
    %v1491 = vadd.f32 %v1477, %v1490
    %1492 = vdwg.mxu0
    %1493 = vmatpush.bf16.msra.mxu0 %v985
    %1494 = vmatpush.bf16.msra.mxu0 %v981
    %1495 = vmatpush.bf16.msra.mxu0 %v977
    %1496 = vmatpush.bf16.msra.mxu0 %v973
    %1497 = vmatpush.bf16.msra.mxu0 %v969
    %1498 = vmatpush.bf16.msra.mxu0 %v965
    %1499 = vmatpush.bf16.msra.mxu0 %v961
    %1500 = vmatpush.bf16.msra.mxu0 %v957
    %1501 = vmatmul.bf16.gmra.mxu0 %v61
    %v1502 = vpop.f32.mrf.mxu0
    %v1503 = vadd.f32 %v1489, %v1502
    %v1504 = vpop.f32.mrf.mxu0
    %v1505 = vadd.f32 %v1491, %v1504
    %1506 = vdwg.mxu0
    %1507 = vmatpush.bf16.msra.mxu0 %v1017
    %1508 = vmatpush.bf16.msra.mxu0 %v1013
    %1509 = vmatpush.bf16.msra.mxu0 %v1009
    %1510 = vmatpush.bf16.msra.mxu0 %v1005
    %1511 = vmatpush.bf16.msra.mxu0 %v1001
    %1512 = vmatpush.bf16.msra.mxu0 %v997
    %1513 = vmatpush.bf16.msra.mxu0 %v993
    %1514 = vmatpush.bf16.msra.mxu0 %v989
    %1515 = vmatmul.bf16.gmra.mxu0 %v62
    %v1516 = vpop.f32.mrf.mxu0
    %v1517 = vadd.f32 %v1503, %v1516
    %v1518 = vpop.f32.mrf.mxu0
    %v1519 = vadd.f32 %v1505, %v1518
    %1520 = vdwg.mxu0
    %1521 = vmatpush.bf16.msra.mxu0 %v1049
    %1522 = vmatpush.bf16.msra.mxu0 %v1045
    %1523 = vmatpush.bf16.msra.mxu0 %v1041
    %1524 = vmatpush.bf16.msra.mxu0 %v1037
    %1525 = vmatpush.bf16.msra.mxu0 %v1033
    %1526 = vmatpush.bf16.msra.mxu0 %v1029
    %1527 = vmatpush.bf16.msra.mxu0 %v1025
    %1528 = vmatpush.bf16.msra.mxu0 %v1021
    %1529 = vmatmul.bf16.gmra.mxu0 %v63
    %v1530 = vpop.f32.mrf.mxu0
    %v1531 = vadd.f32 %v1517, %v1530
    %v1532 = vpop.f32.mrf.mxu0
    %v1533 = vadd.f32 %v1519, %v1532
    %1534 = vdwg.mxu0
    %1535 = vmatpush.bf16.msra.mxu0 0
    %1536 = vmatpush.bf16.msra.mxu0 0
    %1537 = vmatpush.bf16.msra.mxu0 0
    %1538 = vmatpush.bf16.msra.mxu0 0
    %1539 = vmatpush.bf16.msra.mxu0 0
    %1540 = vmatpush.bf16.msra.mxu0 0
    %1541 = vmatpush.bf16.msra.mxu0 0
    %1542 = vmatpush.bf16.msra.mxu0 %v1053
    %1543 = vmatmul.bf16.gmra.mxu0 %v1253
    %v1544 = vpop.f32.mrf.mxu0
    %v1545 = vadd.f32 %v1531, %v1544
    %v1546 = vpop.f32.mrf.mxu0
    %v1547 = vadd.f32 %v1533, %v1546
    %1548 = vdwg.mxu0
    %1549 = vmatpush.bf16.msra.mxu0 %v890
    %1550 = vmatpush.bf16.msra.mxu0 %v886
    %1551 = vmatpush.bf16.msra.mxu0 %v882
    %1552 = vmatpush.bf16.msra.mxu0 %v878
    %1553 = vmatpush.bf16.msra.mxu0 %v874
    %1554 = vmatpush.bf16.msra.mxu0 %v870
    %1555 = vmatpush.bf16.msra.mxu0 %v866
    %1556 = vmatpush.bf16.msra.mxu0 %v862
    %1557 = vmatmul.bf16.gmra.mxu0 %v58
    %v1558 = vpop.f32.mrf.mxu0
    %v1559 = vadd.f32 %v266, %v1558
    %v1560 = vpop.f32.mrf.mxu0
    %v1561 = vadd.f32 %v266, %v1560
    %1562 = vdwg.mxu0
    %1563 = vmatpush.bf16.msra.mxu0 %v922
    %1564 = vmatpush.bf16.msra.mxu0 %v918
    %1565 = vmatpush.bf16.msra.mxu0 %v914
    %1566 = vmatpush.bf16.msra.mxu0 %v910
    %1567 = vmatpush.bf16.msra.mxu0 %v906
    %1568 = vmatpush.bf16.msra.mxu0 %v902
    %1569 = vmatpush.bf16.msra.mxu0 %v898
    %1570 = vmatpush.bf16.msra.mxu0 %v894
    %1571 = vmatmul.bf16.gmra.mxu0 %v59
    %v1572 = vpop.f32.mrf.mxu0
    %v1573 = vadd.f32 %v1559, %v1572
    %v1574 = vpop.f32.mrf.mxu0
    %v1575 = vadd.f32 %v1561, %v1574
    %1576 = vdwg.mxu0
    %1577 = vmatpush.bf16.msra.mxu0 %v954
    %1578 = vmatpush.bf16.msra.mxu0 %v950
    %1579 = vmatpush.bf16.msra.mxu0 %v946
    %1580 = vmatpush.bf16.msra.mxu0 %v942
    %1581 = vmatpush.bf16.msra.mxu0 %v938
    %1582 = vmatpush.bf16.msra.mxu0 %v934
    %1583 = vmatpush.bf16.msra.mxu0 %v930
    %1584 = vmatpush.bf16.msra.mxu0 %v926
    %1585 = vmatmul.bf16.gmra.mxu0 %v60
    %v1586 = vpop.f32.mrf.mxu0
    %v1587 = vadd.f32 %v1573, %v1586
    %v1588 = vpop.f32.mrf.mxu0
    %v1589 = vadd.f32 %v1575, %v1588
    %1590 = vdwg.mxu0
    %1591 = vmatpush.bf16.msra.mxu0 %v986
    %1592 = vmatpush.bf16.msra.mxu0 %v982
    %1593 = vmatpush.bf16.msra.mxu0 %v978
    %1594 = vmatpush.bf16.msra.mxu0 %v974
    %1595 = vmatpush.bf16.msra.mxu0 %v970
    %1596 = vmatpush.bf16.msra.mxu0 %v966
    %1597 = vmatpush.bf16.msra.mxu0 %v962
    %1598 = vmatpush.bf16.msra.mxu0 %v958
    %1599 = vmatmul.bf16.gmra.mxu0 %v61
    %v1600 = vpop.f32.mrf.mxu0
    %v1601 = vadd.f32 %v1587, %v1600
    %v1602 = vpop.f32.mrf.mxu0
    %v1603 = vadd.f32 %v1589, %v1602
    %1604 = vdwg.mxu0
    %1605 = vmatpush.bf16.msra.mxu0 %v1018
    %1606 = vmatpush.bf16.msra.mxu0 %v1014
    %1607 = vmatpush.bf16.msra.mxu0 %v1010
    %1608 = vmatpush.bf16.msra.mxu0 %v1006
    %1609 = vmatpush.bf16.msra.mxu0 %v1002
    %1610 = vmatpush.bf16.msra.mxu0 %v998
    %1611 = vmatpush.bf16.msra.mxu0 %v994
    %1612 = vmatpush.bf16.msra.mxu0 %v990
    %1613 = vmatmul.bf16.gmra.mxu0 %v62
    %v1614 = vpop.f32.mrf.mxu0
    %v1615 = vadd.f32 %v1601, %v1614
    %v1616 = vpop.f32.mrf.mxu0
    %v1617 = vadd.f32 %v1603, %v1616
    %1618 = vdwg.mxu0
    %1619 = vmatpush.bf16.msra.mxu0 %v1050
    %1620 = vmatpush.bf16.msra.mxu0 %v1046
    %1621 = vmatpush.bf16.msra.mxu0 %v1042
    %1622 = vmatpush.bf16.msra.mxu0 %v1038
    %1623 = vmatpush.bf16.msra.mxu0 %v1034
    %1624 = vmatpush.bf16.msra.mxu0 %v1030
    %1625 = vmatpush.bf16.msra.mxu0 %v1026
    %1626 = vmatpush.bf16.msra.mxu0 %v1022
    %1627 = vmatmul.bf16.gmra.mxu0 %v63
    %v1628 = vpop.f32.mrf.mxu0
    %v1629 = vadd.f32 %v1615, %v1628
    %v1630 = vpop.f32.mrf.mxu0
    %v1631 = vadd.f32 %v1617, %v1630
    %1632 = vdwg.mxu0
    %1633 = vmatpush.bf16.msra.mxu0 0
    %1634 = vmatpush.bf16.msra.mxu0 0
    %1635 = vmatpush.bf16.msra.mxu0 0
    %1636 = vmatpush.bf16.msra.mxu0 0
    %1637 = vmatpush.bf16.msra.mxu0 0
    %1638 = vmatpush.bf16.msra.mxu0 0
    %1639 = vmatpush.bf16.msra.mxu0 0
    %1640 = vmatpush.bf16.msra.mxu0 %v1054
    %1641 = vmatmul.bf16.gmra.mxu0 %v1253
    %v1642 = vpop.f32.mrf.mxu0
    %v1643 = vadd.f32 %v1629, %v1642
    %v1644 = vpop.f32.mrf.mxu0
    %v1645 = vadd.f32 %v1631, %v1644
    %1646 = vdwg.mxu0
    %v1647 = vmul.f32 %v1349, 0.2
    %v1648 = vmul.f32 %v1447, 0.2
    %v1649 = vmul.f32 %v1545, 0.2
    %v1650 = vmul.f32 %v1643, 0.2
    %v1651 = vmul.f32 %v1351, 0.2
    %v1652 = vmul.f32 %v1449, 0.2
    %v1653 = vmul.f32 %v1547, 0.2
    %v1654 = vmul.f32 %v1645, 0.2
    %v1655 = vmax.f32 %v1349, %v1647
    %v1656 = vmax.f32 %v1447, %v1648
    %v1657 = vmax.f32 %v1545, %v1649
    %v1658 = vmax.f32 %v1643, %v1650
    %v1659 = vmax.f32 %v1351, %v1651
    %v1660 = vmax.f32 %v1449, %v1652
    %v1661 = vmax.f32 %v1547, %v1653
    %v1662 = vmax.f32 %v1645, %v1654
    %v1663 = vpack.c.bf16 %v1659, %v1655
    %v1664 = vpack.c.bf16 %v1660, %v1656
    %v1665 = vpack.c.bf16 %v1661, %v1657
    %v1666 = vpack.c.bf16 %v1662, %v1658
    %v1667 = vld [vmem:[%s3] sm:$0xff]
    %v1668 = vld [vmem:[%s3 + $0x8] sm:$0xff]
    %v1669 = vld [vmem:[%s3 + $0x10] sm:$0xff]
    %v1670 = vld [vmem:[%s3 + $0x18] sm:$0xff]
    %v1671 = vld [vmem:[%s3 + $0x20] sm:$0xff]
    %v1672 = vld [vmem:[%s3 + $0x28] sm:$0xff]
    %v1673 = vld [vmem:[%s3 + $0x30] sm:$0xff]
    %v1674 = vld [vmem:[%s3 + $0x38] sm:$0xff]
    %v1675 = vld [vmem:[%s3 + $0x40] sm:$0xff]
    %v1676 = vld [vmem:[%s3 + $0x48] sm:$0xff]
    %v1677 = vld [vmem:[%s3 + $0x50] sm:$0xff]
    %v1678 = vld [vmem:[%s3 + $0x58] sm:$0xff]
    %v1679 = vld [vmem:[%s3 + $0x60] sm:$0xff]
    %v1680 = vld [vmem:[%s3 + $0x68] sm:$0xff]
    %v1681 = vld [vmem:[%s3 + $0x70] sm:$0xff]
    %v1682 = vld [vmem:[%s3 + $0x78] sm:$0xff]
    %v1683 = vld [vmem:[%s3 + $0x80] sm:$0xff]
    %v1684 = vld [vmem:[%s3 + $0x88] sm:$0xff]
    %v1685 = vld [vmem:[%s3 + $0x90] sm:$0xff]
    %v1686 = vld [vmem:[%s3 + $0x98] sm:$0xff]
    %v1687 = vld [vmem:[%s3 + $0xa0] sm:$0xff]
    %v1688 = vld [vmem:[%s3 + $0xa8] sm:$0xff]
    %v1689 = vld [vmem:[%s3 + $0xb0] sm:$0xff]
    %v1690 = vld [vmem:[%s3 + $0xb8] sm:$0xff]
    %v1691 = vld [vmem:[%s3 + $0xc0] sm:$0xff]
    %v1692 = vld [vmem:[%s3 + $0xc8] sm:$0xff]
    %v1693 = vld [vmem:[%s3 + $0xd0] sm:$0xff]
    %v1694 = vld [vmem:[%s3 + $0xd8] sm:$0xff]
    %v1695 = vld [vmem:[%s3 + $0xe0] sm:$0xff]
    %v1696 = vld [vmem:[%s3 + $0xe8] sm:$0xff]
    %v1697 = vld [vmem:[%s3 + $0xf0] sm:$0xff]
    %v1698 = vld [vmem:[%s3 + $0xf8] sm:$0xff]
    %v1699 = vld [vmem:[%s3 + $0x100] sm:$0xff]
    %v1700 = vld [vmem:[%s3 + $0x108] sm:$0xff]
    %v1701 = vld [vmem:[%s3 + $0x110] sm:$0xff]
    %v1702 = vld [vmem:[%s3 + $0x118] sm:$0xff]
    %v1703 = vld [vmem:[%s3 + $0x120] sm:$0xff]
    %v1704 = vld [vmem:[%s3 + $0x128] sm:$0xff]
    %v1705 = vld [vmem:[%s3 + $0x130] sm:$0xff]
    %v1706 = vld [vmem:[%s3 + $0x138] sm:$0xff]
    %v1707 = vld [vmem:[%s3 + $0x140] sm:$0xff]
    %v1708 = vld [vmem:[%s3 + $0x148] sm:$0xff]
    %v1709 = vld [vmem:[%s3 + $0x150] sm:$0xff]
    %v1710 = vld [vmem:[%s3 + $0x158] sm:$0xff]
    %v1711 = vld [vmem:[%s3 + $0x160] sm:$0xff]
    %v1712 = vld [vmem:[%s3 + $0x168] sm:$0xff]
    %v1713 = vld [vmem:[%s3 + $0x170] sm:$0xff]
    %v1714 = vld [vmem:[%s3 + $0x178] sm:$0xff]
    %v1715 = vld [vmem:[%s3 + $0x180] sm:$0xff]
    %v1716 = vld [vmem:[%s3 + $0x188] sm:$0xff]
    %v1717 = vld [vmem:[%s3 + $0x190] sm:$0xff]
    %v1718 = vld [vmem:[%s3 + $0x198] sm:$0xff]
    %v1719 = vld [vmem:[%s3 + $0x1a0] sm:$0xff]
    %v1720 = vld [vmem:[%s3 + $0x1a8] sm:$0xff]
    %v1721 = vld [vmem:[%s3 + $0x1b0] sm:$0xff]
    %v1722 = vld [vmem:[%s3 + $0x1b8] sm:$0xff]
    %v1723 = vld [vmem:[%s3 + $0x1c0] sm:$0xff]
    %v1724 = vld [vmem:[%s3 + $0x1c8] sm:$0xff]
    %v1725 = vld [vmem:[%s3 + $0x1d0] sm:$0xff]
    %v1726 = vld [vmem:[%s3 + $0x1d8] sm:$0xff]
    %v1727 = vld [vmem:[%s3 + $0x1e0] sm:$0xff]
    %v1728 = vld [vmem:[%s3 + $0x1e8] sm:$0xff]
    %v1729 = vld [vmem:[%s3 + $0x1f0] sm:$0xff]
    %v1730 = vld [vmem:[%s3 + $0x1f8] sm:$0xff]
    %v1731 = vld [vmem:[%s4] sm:$0x3]
    %v1733 = vperm.slane %v1731, 0
    %v1734 = vperm.slane %v1731, 1
    %v1801 = vunpack.c.l.b16 %v1667
    %v1802 = vunpack.c.h.b16 %v1667
    %v1803 = vunpack.c.l.b16 %v1668
    %v1804 = vunpack.c.h.b16 %v1668
    %v1805 = vunpack.c.l.b16 %v1669
    %v1806 = vunpack.c.h.b16 %v1669
    %v1807 = vunpack.c.l.b16 %v1670
    %v1808 = vunpack.c.h.b16 %v1670
    %v1809 = vunpack.c.l.b16 %v1671
    %v1810 = vunpack.c.h.b16 %v1671
    %v1811 = vunpack.c.l.b16 %v1672
    %v1812 = vunpack.c.h.b16 %v1672
    %v1813 = vunpack.c.l.b16 %v1673
    %v1814 = vunpack.c.h.b16 %v1673
    %v1815 = vunpack.c.l.b16 %v1674
    %v1816 = vunpack.c.h.b16 %v1674
    %v1817 = vunpack.c.l.b16 %v1675
    %v1818 = vunpack.c.h.b16 %v1675
    %v1819 = vunpack.c.l.b16 %v1676
    %v1820 = vunpack.c.h.b16 %v1676
    %v1821 = vunpack.c.l.b16 %v1677
    %v1822 = vunpack.c.h.b16 %v1677
    %v1823 = vunpack.c.l.b16 %v1678
    %v1824 = vunpack.c.h.b16 %v1678
    %v1825 = vunpack.c.l.b16 %v1679
    %v1826 = vunpack.c.h.b16 %v1679
    %v1827 = vunpack.c.l.b16 %v1680
    %v1828 = vunpack.c.h.b16 %v1680
    %v1829 = vunpack.c.l.b16 %v1681
    %v1830 = vunpack.c.h.b16 %v1681
    %v1831 = vunpack.c.l.b16 %v1682
    %v1832 = vunpack.c.h.b16 %v1682
    %v1833 = vunpack.c.l.b16 %v1683
    %v1834 = vunpack.c.h.b16 %v1683
    %v1835 = vunpack.c.l.b16 %v1684
    %v1836 = vunpack.c.h.b16 %v1684
    %v1837 = vunpack.c.l.b16 %v1685
    %v1838 = vunpack.c.h.b16 %v1685
    %v1839 = vunpack.c.l.b16 %v1686
    %v1840 = vunpack.c.h.b16 %v1686
    %v1841 = vunpack.c.l.b16 %v1687
    %v1842 = vunpack.c.h.b16 %v1687
    %v1843 = vunpack.c.l.b16 %v1688
    %v1844 = vunpack.c.h.b16 %v1688
    %v1845 = vunpack.c.l.b16 %v1689
    %v1846 = vunpack.c.h.b16 %v1689
    %v1847 = vunpack.c.l.b16 %v1690
    %v1848 = vunpack.c.h.b16 %v1690
    %v1849 = vunpack.c.l.b16 %v1691
    %v1850 = vunpack.c.h.b16 %v1691
    %v1851 = vunpack.c.l.b16 %v1692
    %v1852 = vunpack.c.h.b16 %v1692
    %v1853 = vunpack.c.l.b16 %v1693
    %v1854 = vunpack.c.h.b16 %v1693
    %v1855 = vunpack.c.l.b16 %v1694
    %v1856 = vunpack.c.h.b16 %v1694
    %v1857 = vunpack.c.l.b16 %v1695
    %v1858 = vunpack.c.h.b16 %v1695
    %v1859 = vunpack.c.l.b16 %v1696
    %v1860 = vunpack.c.h.b16 %v1696
    %v1861 = vunpack.c.l.b16 %v1697
    %v1862 = vunpack.c.h.b16 %v1697
    %v1863 = vunpack.c.l.b16 %v1698
    %v1864 = vunpack.c.h.b16 %v1698
    %v1865 = vunpack.c.l.b16 %v1699
    %v1866 = vunpack.c.h.b16 %v1699
    %v1867 = vunpack.c.l.b16 %v1700
    %v1868 = vunpack.c.h.b16 %v1700
    %v1869 = vunpack.c.l.b16 %v1701
    %v1870 = vunpack.c.h.b16 %v1701
    %v1871 = vunpack.c.l.b16 %v1702
    %v1872 = vunpack.c.h.b16 %v1702
    %v1873 = vunpack.c.l.b16 %v1703
    %v1874 = vunpack.c.h.b16 %v1703
    %v1875 = vunpack.c.l.b16 %v1704
    %v1876 = vunpack.c.h.b16 %v1704
    %v1877 = vunpack.c.l.b16 %v1705
    %v1878 = vunpack.c.h.b16 %v1705
    %v1879 = vunpack.c.l.b16 %v1706
    %v1880 = vunpack.c.h.b16 %v1706
    %v1881 = vunpack.c.l.b16 %v1707
    %v1882 = vunpack.c.h.b16 %v1707
    %v1883 = vunpack.c.l.b16 %v1708
    %v1884 = vunpack.c.h.b16 %v1708
    %v1885 = vunpack.c.l.b16 %v1709
    %v1886 = vunpack.c.h.b16 %v1709
    %v1887 = vunpack.c.l.b16 %v1710
    %v1888 = vunpack.c.h.b16 %v1710
    %v1889 = vunpack.c.l.b16 %v1711
    %v1890 = vunpack.c.h.b16 %v1711
    %v1891 = vunpack.c.l.b16 %v1712
    %v1892 = vunpack.c.h.b16 %v1712
    %v1893 = vunpack.c.l.b16 %v1713
    %v1894 = vunpack.c.h.b16 %v1713
    %v1895 = vunpack.c.l.b16 %v1714
    %v1896 = vunpack.c.h.b16 %v1714
    %v1897 = vunpack.c.l.b16 %v1715
    %v1898 = vunpack.c.h.b16 %v1715
    %v1899 = vunpack.c.l.b16 %v1716
    %v1900 = vunpack.c.h.b16 %v1716
    %v1901 = vunpack.c.l.b16 %v1717
    %v1902 = vunpack.c.h.b16 %v1717
    %v1903 = vunpack.c.l.b16 %v1718
    %v1904 = vunpack.c.h.b16 %v1718
    %v1905 = vunpack.c.l.b16 %v1719
    %v1906 = vunpack.c.h.b16 %v1719
    %v1907 = vunpack.c.l.b16 %v1720
    %v1908 = vunpack.c.h.b16 %v1720
    %v1909 = vunpack.c.l.b16 %v1721
    %v1910 = vunpack.c.h.b16 %v1721
    %v1911 = vunpack.c.l.b16 %v1722
    %v1912 = vunpack.c.h.b16 %v1722
    %v1913 = vunpack.c.l.b16 %v1723
    %v1914 = vunpack.c.h.b16 %v1723
    %v1915 = vunpack.c.l.b16 %v1724
    %v1916 = vunpack.c.h.b16 %v1724
    %v1917 = vunpack.c.l.b16 %v1725
    %v1918 = vunpack.c.h.b16 %v1725
    %v1919 = vunpack.c.l.b16 %v1726
    %v1920 = vunpack.c.h.b16 %v1726
    %v1921 = vunpack.c.l.b16 %v1727
    %v1922 = vunpack.c.h.b16 %v1727
    %v1923 = vunpack.c.l.b16 %v1728
    %v1924 = vunpack.c.h.b16 %v1728
    %v1925 = vunpack.c.l.b16 %v1729
    %v1926 = vunpack.c.h.b16 %v1729
    %v1927 = vunpack.c.l.b16 %v1730
    %v1928 = vunpack.c.h.b16 %v1730
    %v1929 = vpack.c.b16 %v1803, %v1801
    %v1930 = vpack.c.b16 %v1804, %v1802
    %v1931 = vpack.c.b16 %v1807, %v1805
    %v1932 = vpack.c.b16 %v1808, %v1806
    %v1933 = vpack.c.b16 %v1811, %v1809
    %v1934 = vpack.c.b16 %v1812, %v1810
    %v1935 = vpack.c.b16 %v1815, %v1813
    %v1936 = vpack.c.b16 %v1816, %v1814
    %v1937 = vpack.c.b16 %v1819, %v1817
    %v1938 = vpack.c.b16 %v1820, %v1818
    %v1939 = vpack.c.b16 %v1823, %v1821
    %v1940 = vpack.c.b16 %v1824, %v1822
    %v1941 = vpack.c.b16 %v1827, %v1825
    %v1942 = vpack.c.b16 %v1828, %v1826
    %v1943 = vpack.c.b16 %v1831, %v1829
    %v1944 = vpack.c.b16 %v1832, %v1830
    %v1945 = vpack.c.b16 %v1835, %v1833
    %v1946 = vpack.c.b16 %v1836, %v1834
    %v1947 = vpack.c.b16 %v1839, %v1837
    %v1948 = vpack.c.b16 %v1840, %v1838
    %v1949 = vpack.c.b16 %v1843, %v1841
    %v1950 = vpack.c.b16 %v1844, %v1842
    %v1951 = vpack.c.b16 %v1847, %v1845
    %v1952 = vpack.c.b16 %v1848, %v1846
    %v1953 = vpack.c.b16 %v1851, %v1849
    %v1954 = vpack.c.b16 %v1852, %v1850
    %v1955 = vpack.c.b16 %v1855, %v1853
    %v1956 = vpack.c.b16 %v1856, %v1854
    %v1957 = vpack.c.b16 %v1859, %v1857
    %v1958 = vpack.c.b16 %v1860, %v1858
    %v1959 = vpack.c.b16 %v1863, %v1861
    %v1960 = vpack.c.b16 %v1864, %v1862
    %v1961 = vpack.c.b16 %v1867, %v1865
    %v1962 = vpack.c.b16 %v1868, %v1866
    %v1963 = vpack.c.b16 %v1871, %v1869
    %v1964 = vpack.c.b16 %v1872, %v1870
    %v1965 = vpack.c.b16 %v1875, %v1873
    %v1966 = vpack.c.b16 %v1876, %v1874
    %v1967 = vpack.c.b16 %v1879, %v1877
    %v1968 = vpack.c.b16 %v1880, %v1878
    %v1969 = vpack.c.b16 %v1883, %v1881
    %v1970 = vpack.c.b16 %v1884, %v1882
    %v1971 = vpack.c.b16 %v1887, %v1885
    %v1972 = vpack.c.b16 %v1888, %v1886
    %v1973 = vpack.c.b16 %v1891, %v1889
    %v1974 = vpack.c.b16 %v1892, %v1890
    %v1975 = vpack.c.b16 %v1895, %v1893
    %v1976 = vpack.c.b16 %v1896, %v1894
    %v1977 = vpack.c.b16 %v1899, %v1897
    %v1978 = vpack.c.b16 %v1900, %v1898
    %v1979 = vpack.c.b16 %v1903, %v1901
    %v1980 = vpack.c.b16 %v1904, %v1902
    %v1981 = vpack.c.b16 %v1907, %v1905
    %v1982 = vpack.c.b16 %v1908, %v1906
    %v1983 = vpack.c.b16 %v1911, %v1909
    %v1984 = vpack.c.b16 %v1912, %v1910
    %v1985 = vpack.c.b16 %v1915, %v1913
    %v1986 = vpack.c.b16 %v1916, %v1914
    %v1987 = vpack.c.b16 %v1919, %v1917
    %v1988 = vpack.c.b16 %v1920, %v1918
    %v1989 = vpack.c.b16 %v1923, %v1921
    %v1990 = vpack.c.b16 %v1924, %v1922
    %v1991 = vpack.c.b16 %v1927, %v1925
    %v1992 = vpack.c.b16 %v1928, %v1926
    %2057 = vmatpush.bf16.msra.mxu0 %v1943
    %2058 = vmatpush.bf16.msra.mxu0 %v1941
    %2059 = vmatpush.bf16.msra.mxu0 %v1939
    %2060 = vmatpush.bf16.msra.mxu0 %v1937
    %2061 = vmatpush.bf16.msra.mxu0 %v1935
    %2062 = vmatpush.bf16.msra.mxu0 %v1933
    %2063 = vmatpush.bf16.msra.mxu0 %v1931
    %2064 = vmatpush.bf16.msra.mxu0 %v1929
    %2065 = vmatmul.bf16.gmra.mxu0 %v1663
    %v2066 = vpop.f32.mrf.mxu0
    %v2067 = vadd.f32 %v1733, %v2066
    %v2068 = vpop.f32.mrf.mxu0
    %v2069 = vadd.f32 %v1733, %v2068
    %2070 = vdwg.mxu0
    %2071 = vmatpush.bf16.msra.mxu0 %v1959
    %2072 = vmatpush.bf16.msra.mxu0 %v1957
    %2073 = vmatpush.bf16.msra.mxu0 %v1955
    %2074 = vmatpush.bf16.msra.mxu0 %v1953
    %2075 = vmatpush.bf16.msra.mxu0 %v1951
    %2076 = vmatpush.bf16.msra.mxu0 %v1949
    %2077 = vmatpush.bf16.msra.mxu0 %v1947
    %2078 = vmatpush.bf16.msra.mxu0 %v1945
    %2079 = vmatmul.bf16.gmra.mxu0 %v1664
    %v2080 = vpop.f32.mrf.mxu0
    %v2081 = vadd.f32 %v2067, %v2080
    %v2082 = vpop.f32.mrf.mxu0
    %v2083 = vadd.f32 %v2069, %v2082
    %2084 = vdwg.mxu0
    %2085 = vmatpush.bf16.msra.mxu0 %v1975
    %2086 = vmatpush.bf16.msra.mxu0 %v1973
    %2087 = vmatpush.bf16.msra.mxu0 %v1971
    %2088 = vmatpush.bf16.msra.mxu0 %v1969
    %2089 = vmatpush.bf16.msra.mxu0 %v1967
    %2090 = vmatpush.bf16.msra.mxu0 %v1965
    %2091 = vmatpush.bf16.msra.mxu0 %v1963
    %2092 = vmatpush.bf16.msra.mxu0 %v1961
    %2093 = vmatmul.bf16.gmra.mxu0 %v1665
    %v2094 = vpop.f32.mrf.mxu0
    %v2095 = vadd.f32 %v2081, %v2094
    %v2096 = vpop.f32.mrf.mxu0
    %v2097 = vadd.f32 %v2083, %v2096
    %2098 = vdwg.mxu0
    %2099 = vmatpush.bf16.msra.mxu0 %v1991
    %2100 = vmatpush.bf16.msra.mxu0 %v1989
    %2101 = vmatpush.bf16.msra.mxu0 %v1987
    %2102 = vmatpush.bf16.msra.mxu0 %v1985
    %2103 = vmatpush.bf16.msra.mxu0 %v1983
    %2104 = vmatpush.bf16.msra.mxu0 %v1981
    %2105 = vmatpush.bf16.msra.mxu0 %v1979
    %2106 = vmatpush.bf16.msra.mxu0 %v1977
    %2107 = vmatmul.bf16.gmra.mxu0 %v1666
    %v2108 = vpop.f32.mrf.mxu0
    %v2109 = vadd.f32 %v2095, %v2108
    %v2110 = vpop.f32.mrf.mxu0
    %v2111 = vadd.f32 %v2097, %v2110
    %2112 = vdwg.mxu0
    %2113 = vmatpush.bf16.msra.mxu0 %v1944
    %2114 = vmatpush.bf16.msra.mxu0 %v1942
    %2115 = vmatpush.bf16.msra.mxu0 %v1940
    %2116 = vmatpush.bf16.msra.mxu0 %v1938
    %2117 = vmatpush.bf16.msra.mxu0 %v1936
    %2118 = vmatpush.bf16.msra.mxu0 %v1934
    %2119 = vmatpush.bf16.msra.mxu0 %v1932
    %2120 = vmatpush.bf16.msra.mxu0 %v1930
    %2121 = vmatmul.bf16.gmra.mxu0 %v1663
    %v2122 = vpop.f32.mrf.mxu0
    %v2123 = vadd.f32 %v1734, %v2122
    %v2124 = vpop.f32.mrf.mxu0
    %v2125 = vadd.f32 %v1734, %v2124
    %2126 = vdwg.mxu0
    %2127 = vmatpush.bf16.msra.mxu0 %v1960
    %2128 = vmatpush.bf16.msra.mxu0 %v1958
    %2129 = vmatpush.bf16.msra.mxu0 %v1956
    %2130 = vmatpush.bf16.msra.mxu0 %v1954
    %2131 = vmatpush.bf16.msra.mxu0 %v1952
    %2132 = vmatpush.bf16.msra.mxu0 %v1950
    %2133 = vmatpush.bf16.msra.mxu0 %v1948
    %2134 = vmatpush.bf16.msra.mxu0 %v1946
    %2135 = vmatmul.bf16.gmra.mxu0 %v1664
    %v2136 = vpop.f32.mrf.mxu0
    %v2137 = vadd.f32 %v2123, %v2136
    %v2138 = vpop.f32.mrf.mxu0
    %v2139 = vadd.f32 %v2125, %v2138
    %2140 = vdwg.mxu0
    %2141 = vmatpush.bf16.msra.mxu0 %v1976
    %2142 = vmatpush.bf16.msra.mxu0 %v1974
    %2143 = vmatpush.bf16.msra.mxu0 %v1972
    %2144 = vmatpush.bf16.msra.mxu0 %v1970
    %2145 = vmatpush.bf16.msra.mxu0 %v1968
    %2146 = vmatpush.bf16.msra.mxu0 %v1966
    %2147 = vmatpush.bf16.msra.mxu0 %v1964
    %2148 = vmatpush.bf16.msra.mxu0 %v1962
    %2149 = vmatmul.bf16.gmra.mxu0 %v1665
    %v2150 = vpop.f32.mrf.mxu0
    %v2151 = vadd.f32 %v2137, %v2150
    %v2152 = vpop.f32.mrf.mxu0
    %v2153 = vadd.f32 %v2139, %v2152
    %2154 = vdwg.mxu0
    %2155 = vmatpush.bf16.msra.mxu0 %v1992
    %2156 = vmatpush.bf16.msra.mxu0 %v1990
    %2157 = vmatpush.bf16.msra.mxu0 %v1988
    %2158 = vmatpush.bf16.msra.mxu0 %v1986
    %2159 = vmatpush.bf16.msra.mxu0 %v1984
    %2160 = vmatpush.bf16.msra.mxu0 %v1982
    %2161 = vmatpush.bf16.msra.mxu0 %v1980
    %2162 = vmatpush.bf16.msra.mxu0 %v1978
    %2163 = vmatmul.bf16.gmra.mxu0 %v1666
    %v2164 = vpop.f32.mrf.mxu0
    %v2165 = vadd.f32 %v2151, %v2164
    %v2166 = vpop.f32.mrf.mxu0
    %v2167 = vadd.f32 %v2153, %v2166
    %2168 = vdwg.mxu0
    %v2169 = vmul.f32 %v2109, 0.2
    %v2170 = vmul.f32 %v2165, 0.2
    %v2171 = vmul.f32 %v2111, 0.2
    %v2172 = vmul.f32 %v2167, 0.2
    %v2173 = vmax.f32 %v2109, %v2169
    %v2174 = vmax.f32 %v2165, %v2170
    %v2175 = vmax.f32 %v2111, %v2171
    %v2176 = vmax.f32 %v2167, %v2172
    %v2177 = vpack.c.bf16 %v2175, %v2173
    %v2178 = vpack.c.bf16 %v2176, %v2174
    %v2179 = vld [vmem:[%s5] sm:$0xf]
    %v2180 = vld [vmem:[%s5 + $0x4] sm:$0xf]
    %v2181 = vld [vmem:[%s5 + $0x8] sm:$0xf]
    %v2182 = vld [vmem:[%s5 + $0xc] sm:$0xf]
    %v2183 = vld [vmem:[%s5 + $0x10] sm:$0xf]
    %v2184 = vld [vmem:[%s5 + $0x14] sm:$0xf]
    %v2185 = vld [vmem:[%s5 + $0x18] sm:$0xf]
    %v2186 = vld [vmem:[%s5 + $0x1c] sm:$0xf]
    %v2187 = vld [vmem:[%s5 + $0x20] sm:$0xf]
    %v2188 = vld [vmem:[%s5 + $0x24] sm:$0xf]
    %v2189 = vld [vmem:[%s5 + $0x28] sm:$0xf]
    %v2190 = vld [vmem:[%s5 + $0x2c] sm:$0xf]
    %v2191 = vld [vmem:[%s5 + $0x30] sm:$0xf]
    %v2192 = vld [vmem:[%s5 + $0x34] sm:$0xf]
    %v2193 = vld [vmem:[%s5 + $0x38] sm:$0xf]
    %v2194 = vld [vmem:[%s5 + $0x3c] sm:$0xf]
    %v2195 = vld [vmem:[%s5 + $0x40] sm:$0xf]
    %v2196 = vld [vmem:[%s5 + $0x44] sm:$0xf]
    %v2197 = vld [vmem:[%s5 + $0x48] sm:$0xf]
    %v2198 = vld [vmem:[%s5 + $0x4c] sm:$0xf]
    %v2199 = vld [vmem:[%s5 + $0x50] sm:$0xf]
    %v2200 = vld [vmem:[%s5 + $0x54] sm:$0xf]
    %v2201 = vld [vmem:[%s5 + $0x58] sm:$0xf]
    %v2202 = vld [vmem:[%s5 + $0x5c] sm:$0xf]
    %v2203 = vld [vmem:[%s5 + $0x60] sm:$0xf]
    %v2204 = vld [vmem:[%s5 + $0x64] sm:$0xf]
    %v2205 = vld [vmem:[%s5 + $0x68] sm:$0xf]
    %v2206 = vld [vmem:[%s5 + $0x6c] sm:$0xf]
    %v2207 = vld [vmem:[%s5 + $0x70] sm:$0xf]
    %v2208 = vld [vmem:[%s5 + $0x74] sm:$0xf]
    %v2209 = vld [vmem:[%s5 + $0x78] sm:$0xf]
    %v2210 = vld [vmem:[%s5 + $0x7c] sm:$0xf]
    %s2211 = sld [smem:[#allocation2]]
    %v2212 = vstv %s2211
    %v2245 = vunpack.c.l.b16 %v2179
    %v2246 = vunpack.c.l.b16 %v2180
    %v2247 = vunpack.c.l.b16 %v2181
    %v2248 = vunpack.c.l.b16 %v2182
    %v2249 = vunpack.c.l.b16 %v2183
    %v2250 = vunpack.c.l.b16 %v2184
    %v2251 = vunpack.c.l.b16 %v2185
    %v2252 = vunpack.c.l.b16 %v2186
    %v2253 = vunpack.c.l.b16 %v2187
    %v2254 = vunpack.c.l.b16 %v2188
    %v2255 = vunpack.c.l.b16 %v2189
    %v2256 = vunpack.c.l.b16 %v2190
    %v2257 = vunpack.c.l.b16 %v2191
    %v2258 = vunpack.c.l.b16 %v2192
    %v2259 = vunpack.c.l.b16 %v2193
    %v2260 = vunpack.c.l.b16 %v2194
    %v2261 = vunpack.c.l.b16 %v2195
    %v2262 = vunpack.c.l.b16 %v2196
    %v2263 = vunpack.c.l.b16 %v2197
    %v2264 = vunpack.c.l.b16 %v2198
    %v2265 = vunpack.c.l.b16 %v2199
    %v2266 = vunpack.c.l.b16 %v2200
    %v2267 = vunpack.c.l.b16 %v2201
    %v2268 = vunpack.c.l.b16 %v2202
    %v2269 = vunpack.c.l.b16 %v2203
    %v2270 = vunpack.c.l.b16 %v2204
    %v2271 = vunpack.c.l.b16 %v2205
    %v2272 = vunpack.c.l.b16 %v2206
    %v2273 = vunpack.c.l.b16 %v2207
    %v2274 = vunpack.c.l.b16 %v2208
    %v2275 = vunpack.c.l.b16 %v2209
    %v2276 = vunpack.c.l.b16 %v2210
    %v2277 = vpack.c.b16 %v2246, %v2245
    %v2278 = vpack.c.b16 %v2248, %v2247
    %v2279 = vpack.c.b16 %v2250, %v2249
    %v2280 = vpack.c.b16 %v2252, %v2251
    %v2281 = vpack.c.b16 %v2254, %v2253
    %v2282 = vpack.c.b16 %v2256, %v2255
    %v2283 = vpack.c.b16 %v2258, %v2257
    %v2284 = vpack.c.b16 %v2260, %v2259
    %v2285 = vpack.c.b16 %v2262, %v2261
    %v2286 = vpack.c.b16 %v2264, %v2263
    %v2287 = vpack.c.b16 %v2266, %v2265
    %v2288 = vpack.c.b16 %v2268, %v2267
    %v2289 = vpack.c.b16 %v2270, %v2269
    %v2290 = vpack.c.b16 %v2272, %v2271
    %v2291 = vpack.c.b16 %v2274, %v2273
    %v2292 = vpack.c.b16 %v2276, %v2275
    %2309 = vmatpush.bf16.msra.mxu0 %v2284
    %2310 = vmatpush.bf16.msra.mxu0 %v2283
    %2311 = vmatpush.bf16.msra.mxu0 %v2282
    %2312 = vmatpush.bf16.msra.mxu0 %v2281
    %2313 = vmatpush.bf16.msra.mxu0 %v2280
    %2314 = vmatpush.bf16.msra.mxu0 %v2279
    %2315 = vmatpush.bf16.msra.mxu0 %v2278
    %2316 = vmatpush.bf16.msra.mxu0 %v2277
    %2317 = vmatmul.bf16.gmra.mxu0 %v2177
    %v2318 = vpop.f32.mrf.mxu0
    %v2319 = vadd.f32 %v2212, %v2318
    %v2320 = vpop.f32.mrf.mxu0
    %v2321 = vadd.f32 %v2212, %v2320
    %2322 = vdwg.mxu0
    %2323 = vmatpush.bf16.msra.mxu0 %v2292
    %2324 = vmatpush.bf16.msra.mxu0 %v2291
    %2325 = vmatpush.bf16.msra.mxu0 %v2290
    %2326 = vmatpush.bf16.msra.mxu0 %v2289
    %2327 = vmatpush.bf16.msra.mxu0 %v2288
    %2328 = vmatpush.bf16.msra.mxu0 %v2287
    %2329 = vmatpush.bf16.msra.mxu0 %v2286
    %2330 = vmatpush.bf16.msra.mxu0 %v2285
    %2331 = vmatmul.bf16.gmra.mxu0 %v2178
    %v2332 = vpop.f32.mrf.mxu0
    %v2333 = vadd.f32 %v2319, %v2332
    %v2334 = vpop.f32.mrf.mxu0
    %v2335 = vadd.f32 %v2321, %v2334
    %2336 = vdwg.mxu0
    %v2337 = vsub.f32 0.0, %v2333
    %v2338 = vsub.f32 0.0, %v2335
    %v2339 = vmul.f32 %v2337, 1.442695
    %v2340 = vpow.pop %v2339
    %v2341 = vmul.f32 %v2338, 1.442695
    %v2342 = vpow.pop %v2341
    %v2343 = vadd.f32 %v2340, 1.0
    %v2344 = vadd.f32 %v2342, 1.0
    %v2345 = vrcp.pop %v2343
    %v2346 = vmul.f32 %v2343, %v2345
    %v2347 = vsub.f32 1.0, %v2346
    %v2348 = vmul.f32 %v2345, %v2347
    %v2349 = vadd.f32 %v2345, %v2348
    %vm2350 = vweird.f32 %v2343
    %vm2351 = vweird.f32 %v2345
    %vm2352 = vmor %vm2350, %vm2351
    %v2353 = vsel %vm2352, %v2345, %v2349
    %v2354 = vand.u32 2147483647, %v2343
    %vm2355 = vcmp.eq.f32.partialorder %v2354, 8.507059e+37
    %v2356 = vand.u32 %v2343, 2147483648
    %v2357 = vor.u32 1.1754944e-38, %v2356
    %v2358 = vsel %vm2355, %v2357, %v2353
    %v2359 = vmul.f32 1.0, %v2358
    %v2360 = vrcp.pop %v2344
    %v2361 = vmul.f32 %v2344, %v2360
    %v2362 = vsub.f32 1.0, %v2361
    %v2363 = vmul.f32 %v2360, %v2362
    %v2364 = vadd.f32 %v2360, %v2363
    %vm2365 = vweird.f32 %v2344
    %vm2366 = vweird.f32 %v2360
    %vm2367 = vmor %vm2365, %vm2366
    %v2368 = vsel %vm2367, %v2360, %v2364
    %v2369 = vand.u32 2147483647, %v2344
    %vm2370 = vcmp.eq.f32.partialorder %v2369, 8.507059e+37
    %v2371 = vand.u32 %v2344, 2147483648
    %v2372 = vor.u32 1.1754944e-38, %v2371
    %v2373 = vsel %vm2370, %v2372, %v2368
    %v2374 = vmul.f32 1.0, %v2373
    %2375 = vst [vmem:[%s7] sm:$0xff] %v2359
    %2376 = vst [vmem:[%s7 + $0x8] sm:$0xff] %v2374
    // Predicated region
    $region34: #{discriminator_forward.1} parent=1 // pred_check
      _
    $region35: #{discriminator_forward.1} parent=1 // pred_check_branch
      %2378 = sbr.rel (0) target = $region37
    $region36: #{discriminator_forward.1} parent=1 // pred_region
      _
    $region37: #{discriminator_forward.1} parent=1 // pred_fallthru
      _
    // Predicated region
    $region38: #{discriminator_forward.1} parent=1 // pred_check
      _
    $region39: #{discriminator_forward.1} parent=1 // pred_check_branch
      %2380 = sbr.rel (0) target = $region41
    $region40: #{discriminator_forward.1} parent=1 // pred_region
      _
    $region41: #{discriminator_forward.1} parent=1 // pred_fallthru
      _
    %2381 = vsyncpa [#allocation4], 1

</llo_original>
